<compile_context>
chip_gen: v5e
topology: v5e:2x2
jax: 0.10.0
libtpu: 0.0.40
codegen_flags: <defaults>
</compile_context>

<pallas_src>
import math
import jax
import jax.numpy as jnp
from jax import lax
from jax.experimental import pallas as pl
from jax.experimental.pallas import tpu as pltpu


def _gru_bidir_kernel(gi_ref, h0_ref, whhf_ref, whhb_ref, bhhf_ref, bhhb_ref,
                      yf_ref, yb_ref):
    """Fused bidirectional GRU recurrence for one layer.

    gi_ref:   (T, B, 6H) precomputed x @ [W_ih_f^T | W_ih_b^T] + [b_ih_f|b_ih_b].
    h0_ref:   (2, B, H)  initial hidden states, [0]=forward, [1]=backward.
    whhf_ref: (H, 3H)    forward  W_hh^T.
    whhb_ref: (H, 3H)    backward W_hh^T.
    bhhf_ref: (1, 3H)    forward  b_hh.
    bhhb_ref: (1, 3H)    backward b_hh.
    yf_ref:   (T, B, H)  forward-direction output (lane-dense, full-row stores).
    yb_ref:   (T, B, H)  backward-direction output.
    """
    T = gi_ref.shape[0]
    H = yf_ref.shape[2]

    # Loop-invariant reads hoisted out of the time loop.
    whh_f = whhf_ref[...]
    whh_b = whhb_ref[...]
    bhh_f = bhhf_ref[...]
    bhh_b = bhhb_ref[...]

    def sigmoid(x):
        # Single EUP transcendental (tanh) instead of a VALU divide chain.
        return 0.5 * (jnp.tanh(0.5 * x) + 1.0)

    def cell(gi, gh, h_prev):
        # PyTorch GRU, gate order [r, z, n], b_hn inside r * (.):
        #   r = sigma(i_r + h_r); z = sigma(i_z + h_z)
        #   n = tanh(i_n + r * h_n); h = (1 - z) * n + z * h_prev
        i_r, i_z, i_n = gi[:, :H], gi[:, H:2 * H], gi[:, 2 * H:]
        h_r, h_z, h_n = gh[:, :H], gh[:, H:2 * H], gh[:, 2 * H:]
        r = sigmoid(i_r + h_r)
        z = sigmoid(i_z + h_z)
        n = jnp.tanh(i_n + r * h_n)
        return (1.0 - z) * n + z * h_prev

    def step(t, carry):
        h_f, h_b = carry                          # vreg-resident hidden states
        tb = T - 1 - t                            # backward-direction time index
        gi_t = gi_ref[t]                          # (B, 6H) full-row load
        gi_tb = gi_ref[tb]                        # (B, 6H)
        gh_f = jnp.dot(h_f, whh_f, preferred_element_type=jnp.float32) + bhh_f
        gh_b = jnp.dot(h_b, whh_b, preferred_element_type=jnp.float32) + bhh_b
        h_f = cell(gi_t[:, :3 * H], gh_f, h_f)
        h_b = cell(gi_tb[:, 3 * H:], gh_b, h_b)
        yf_ref[t] = h_f.astype(yf_ref.dtype)      # full-row unmasked store
        yb_ref[tb] = h_b.astype(yb_ref.dtype)
        return (h_f, h_b)

    # Fully unrolled: cross-step visibility lets the scheduler overlap MXU
    # drain / EUP transcendentals / stores of adjacent steps.
    lax.fori_loop(0, T, step, (h0_ref[0], h0_ref[1]), unroll=True)


def gru_bidir_layer(gi, h0_pair, q):
    """One bidirectional GRU layer recurrence.

    gi:      (T, B, 6H) precomputed input projections (both directions).
    h0_pair: (2, B, H) initial hidden states.
    q:       packed layer params (see pack_gru_params).
    Returns (y_f, y_b), each (T, B, H).
    """
    T, B, _ = gi.shape
    H = q["whh_f_t"].shape[0]
    vmem = pl.BlockSpec(memory_space=pltpu.MemorySpace.VMEM)
    return pl.pallas_call(
        _gru_bidir_kernel,
        out_shape=(jax.ShapeDtypeStruct((T, B, H), jnp.float32),
                   jax.ShapeDtypeStruct((T, B, H), jnp.float32)),
        in_specs=[vmem] * 6,
        out_specs=(vmem, vmem),
        compiler_params=pltpu.CompilerParams(vmem_limit_bytes=32 * 1024 * 1024),
    )(gi, h0_pair, q["whh_f_t"], q["whh_b_t"], q["bhh_f"], q["bhh_b"])


def gru_block_forward(X, packed, h0):
    """Bidirectional multi-layer GRU. X: (B, T, D) -> (B, T, 2H), batch_first."""
    B, T, Din = X.shape
    H = packed[0]["whh_f_t"].shape[0]
    x = jnp.transpose(X, (1, 0, 2)).astype(jnp.float32)      # (T, B, Din)

    # Layer 0: one fused (T*B, Din) @ (Din, 6H) input-projection matmul for
    # both directions, hoisted out of the serial recurrence.
    gi = (x.reshape(T * B, Din) @ packed[0]["wih"]
          + packed[0]["bih"]).reshape(T, B, 6 * H)
    y_f, y_b = gru_bidir_layer(gi, h0[0:2], packed[0])

    # Layers > 0: consume y_f / y_b with two matmuls (no concat copy).
    for l in range(1, len(packed)):
        q = packed[l]
        gi = (y_f.reshape(T * B, H) @ q["wih_top"]
              + y_b.reshape(T * B, H) @ q["wih_bot"]
              + q["bih"]).reshape(T, B, 6 * H)
        y_f, y_b = gru_bidir_layer(gi, h0[2 * l:2 * l + 2], q)

    y = jnp.concatenate([y_f, y_b], axis=-1)                  # (T, B, 2H)
    return jnp.transpose(y, (1, 0, 2))                        # batch_first


gru_block_forward_jit = jax.jit(gru_block_forward)


def init_gru_params(key, input_size, hidden_size, num_layers):
    """Params matching nn.GRU shapes & U(-1/sqrt(H), 1/sqrt(H)) init."""
    k = 1.0 / math.sqrt(hidden_size)
    params = []
    for layer in range(num_layers):
        in_l = input_size if layer == 0 else 2 * hidden_size
        layer_p = {}
        for tag in ("f", "b"):
            key, k1, k2, k3, k4 = jax.random.split(key, 5)
            layer_p[f"w_ih_{tag}"] = jax.random.uniform(
                k1, (3 * hidden_size, in_l), jnp.float32, -k, k)
            layer_p[f"w_hh_{tag}"] = jax.random.uniform(
                k2, (3 * hidden_size, hidden_size), jnp.float32, -k, k)
            layer_p[f"b_ih_{tag}"] = jax.random.uniform(
                k3, (3 * hidden_size,), jnp.float32, -k, k)
            layer_p[f"b_hh_{tag}"] = jax.random.uniform(
                k4, (3 * hidden_size,), jnp.float32, -k, k)
        params.append(layer_p)
    return params


def pack_gru_params(params):
    """One-time repacking (transposes / concats) hoisted out of the forward."""
    packed = []
    for l, p in enumerate(params):
        H = p["w_hh_f"].shape[1]
        q = {
            "whh_f_t": jnp.asarray(p["w_hh_f"].T, jnp.float32),      # (H, 3H)
            "whh_b_t": jnp.asarray(p["w_hh_b"].T, jnp.float32),      # (H, 3H)
            "bhh_f": p["b_hh_f"].reshape(1, 3 * H).astype(jnp.float32),
            "bhh_b": p["b_hh_b"].reshape(1, 3 * H).astype(jnp.float32),
            "bih": jnp.concatenate([p["b_ih_f"], p["b_ih_b"]]
                                   ).reshape(1, 6 * H).astype(jnp.float32),
        }
        wih_cat = jnp.concatenate(
            [p["w_ih_f"].T, p["w_ih_b"].T], axis=1).astype(jnp.float32)
        if l == 0:
            q["wih"] = wih_cat                                        # (Din, 6H)
        else:
            q["wih_top"] = wih_cat[:H]                                # (H, 6H)
            q["wih_bot"] = wih_cat[H:]                                # (H, 6H)
        packed.append(q)
    return packed


def gru_block_reference(X, params, h0):
    """Pure-JAX (lax.scan) reference of torch.nn.GRU(bidirectional, batch_first)."""
    def one_dir(x_tbd, h, w_ih, w_hh, b_ih, b_hh):
        H = w_hh.shape[1]

        def step(h, x_t):
            gi = x_t @ w_ih.T + b_ih
            gh = h @ w_hh.T + b_hh
            r = jax.nn.sigmoid(gi[:, :H] + gh[:, :H])
            z = jax.nn.sigmoid(gi[:, H:2 * H] + gh[:, H:2 * H])
            n = jnp.tanh(gi[:, 2 * H:] + r * gh[:, 2 * H:])
            h_new = (1.0 - z) * n + z * h
            return h_new, h_new

        _, ys = lax.scan(step, h, x_tbd)
        return ys

    x = jnp.transpose(X, (1, 0, 2))
    for l, p in enumerate(params):
        y_f = one_dir(x, h0[2 * l], p["w_ih_f"], p["w_hh_f"],
                      p["b_ih_f"], p["b_hh_f"])
        y_b = one_dir(x[::-1], h0[2 * l + 1], p["w_ih_b"], p["w_hh_b"],
                      p["b_ih_b"], p["b_hh_b"])[::-1]
        x = jnp.concatenate([y_f, y_b], axis=-1)
    return jnp.transpose(x, (1, 0, 2))


if __name__ == "__main__":
    # Small shapes consistent with the module: X is (batch, seq, input_size).
    batch, seq, input_size, hidden_size, num_layers = 4, 8, 16, 32, 2

    key = jax.random.PRNGKey(0)
    kx, kh, kp = jax.random.split(key, 3)

    X = jax.random.normal(kx, (batch, seq, input_size), jnp.float32)
    # The PyTorch module draws h0 = torch.randn(...) each forward; here we draw
    # it deterministically from PRNGKey(0) instead.
    h0 = jax.random.normal(kh, (num_layers * 2, batch, hidden_size), jnp.float32)
    params = init_gru_params(kp, input_size, hidden_size, num_layers)
    packed = pack_gru_params(params)   # one-time repacking, outside the jit path

    out = jax.block_until_ready(gru_block_forward_jit(X, packed, h0))
    ref = jax.block_until_ready(gru_block_reference(X, params, h0))

    assert out.shape == (batch, seq, 2 * hidden_size), out.shape
    err = float(jnp.max(jnp.abs(out - ref)))
    assert jnp.allclose(out, ref, atol=1e-4, rtol=1e-4), (
        f"Pallas GRU mismatch vs reference, max abs err = {err}")

    print("KERNEL_OK")
</pallas_src>

<mosaic_0001>
module attributes {stable_mosaic.version = 11 : i64} {
  func.func @_gru_bidir_kernel(%arg0: memref<8x4x192xf32, #tpu.memory_space<vmem>>, %arg1: memref<2x4x32xf32, #tpu.memory_space<vmem>>, %arg2: memref<32x96xf32, #tpu.memory_space<vmem>>, %arg3: memref<32x96xf32, #tpu.memory_space<vmem>>, %arg4: memref<1x96xf32, #tpu.memory_space<vmem>>, %arg5: memref<1x96xf32, #tpu.memory_space<vmem>>, %arg6: memref<8x4x32xf32, #tpu.memory_space<vmem>>, %arg7: memref<8x4x32xf32, #tpu.memory_space<vmem>>) attributes {dimension_semantics = [], scalar_prefetch = 0 : i64, scratch_operands = 0 : i64, tpu.core_type = #tpu.core_type<tc>} {
    %c0 = arith.constant 0 : index
    %c0_0 = arith.constant 0 : index
    %0 = vector.load %arg2[%c0, %c0_0] : memref<32x96xf32, #tpu.memory_space<vmem>>, vector<32x96xf32>
    %c0_1 = arith.constant 0 : index
    %c0_2 = arith.constant 0 : index
    %1 = vector.load %arg3[%c0_1, %c0_2] : memref<32x96xf32, #tpu.memory_space<vmem>>, vector<32x96xf32>
    %c0_3 = arith.constant 0 : index
    %c0_4 = arith.constant 0 : index
    %2 = vector.load %arg4[%c0_3, %c0_4] : memref<1x96xf32, #tpu.memory_space<vmem>>, vector<1x96xf32>
    %c0_5 = arith.constant 0 : index
    %c0_6 = arith.constant 0 : index
    %3 = vector.load %arg5[%c0_5, %c0_6] : memref<1x96xf32, #tpu.memory_space<vmem>>, vector<1x96xf32>
    %c0_7 = arith.constant 0 : index
    %c0_8 = arith.constant 0 : index
    %c0_9 = arith.constant 0 : index
    %4 = vector.load %arg1[%c0_7, %c0_8, %c0_9] : memref<2x4x32xf32, #tpu.memory_space<vmem>>, vector<1x4x32xf32>
    %5 = vector.shape_cast %4 : vector<1x4x32xf32> to vector<4x32xf32>
    %c1 = arith.constant 1 : index
    %c0_10 = arith.constant 0 : index
    %c0_11 = arith.constant 0 : index
    %6 = vector.load %arg1[%c1, %c0_10, %c0_11] : memref<2x4x32xf32, #tpu.memory_space<vmem>>, vector<1x4x32xf32>
    %7 = vector.shape_cast %6 : vector<1x4x32xf32> to vector<4x32xf32>
    %c0_i32 = arith.constant 0 : i32
    %c7_i32 = arith.constant 7 : i32
    %8 = arith.subi %c7_i32, %c0_i32 : i32
    %9 = arith.index_cast %c0_i32 : i32 to index
    %c0_12 = arith.constant 0 : index
    %c0_13 = arith.constant 0 : index
    %10 = vector.load %arg0[%9, %c0_12, %c0_13] : memref<8x4x192xf32, #tpu.memory_space<vmem>>, vector<1x4x192xf32>
    %11 = vector.shape_cast %10 : vector<1x4x192xf32> to vector<4x192xf32>
    %12 = arith.index_cast %8 : i32 to index
    %c0_14 = arith.constant 0 : index
    %c0_15 = arith.constant 0 : index
    %13 = vector.load %arg0[%12, %c0_14, %c0_15] : memref<8x4x192xf32, #tpu.memory_space<vmem>>, vector<1x4x192xf32>
    %14 = vector.shape_cast %13 : vector<1x4x192xf32> to vector<4x192xf32>
    %cst = arith.constant dense<0.000000e+00> : vector<4x96xf32>
    %15 = tpu.matmul %5, %0, %cst {dimension_numbers = #tpu.dot_dimension_numbers<[1], [0], [0], [1], [0, 0, 1, 1], [], []>} : vector<4x32xf32>, vector<32x96xf32>, vector<4x96xf32> -> vector<4x96xf32>
    %16 = vector.broadcast %2 : vector<1x96xf32> to vector<4x96xf32>
    %17 = arith.addf %15, %16 : vector<4x96xf32>
    %cst_16 = arith.constant dense<0.000000e+00> : vector<4x96xf32>
    %18 = tpu.matmul %7, %1, %cst_16 {dimension_numbers = #tpu.dot_dimension_numbers<[1], [0], [0], [1], [0, 0, 1, 1], [], []>} : vector<4x32xf32>, vector<32x96xf32>, vector<4x96xf32> -> vector<4x96xf32>
    %19 = vector.broadcast %3 : vector<1x96xf32> to vector<4x96xf32>
    %20 = arith.addf %18, %19 : vector<4x96xf32>
    %21 = vector.extract_strided_slice %11 {offsets = [0, 0], sizes = [4, 96], strides = [1, 1]} : vector<4x192xf32> to vector<4x96xf32>
    %22 = vector.extract_strided_slice %21 {offsets = [0, 0], sizes = [4, 32], strides = [1, 1]} : vector<4x96xf32> to vector<4x32xf32>
    %23 = vector.extract_strided_slice %21 {offsets = [0, 32], sizes = [4, 32], strides = [1, 1]} : vector<4x96xf32> to vector<4x32xf32>
    %24 = vector.extract_strided_slice %21 {offsets = [0, 64], sizes = [4, 32], strides = [1, 1]} : vector<4x96xf32> to vector<4x32xf32>
    %25 = vector.extract_strided_slice %17 {offsets = [0, 0], sizes = [4, 32], strides = [1, 1]} : vector<4x96xf32> to vector<4x32xf32>
    %26 = vector.extract_strided_slice %17 {offsets = [0, 32], sizes = [4, 32], strides = [1, 1]} : vector<4x96xf32> to vector<4x32xf32>
    %27 = vector.extract_strided_slice %17 {offsets = [0, 64], sizes = [4, 32], strides = [1, 1]} : vector<4x96xf32> to vector<4x32xf32>
    %28 = arith.addf %22, %25 : vector<4x32xf32>
    %cst_17 = arith.constant 5.000000e-01 : f32
    %29 = vector.broadcast %cst_17 : f32 to vector<4x32xf32>
    %30 = arith.mulf %29, %28 : vector<4x32xf32>
    %31 = math.tanh %30 : vector<4x32xf32>
    %cst_18 = arith.constant 1.000000e+00 : f32
    %32 = vector.broadcast %cst_18 : f32 to vector<4x32xf32>
    %33 = arith.addf %31, %32 : vector<4x32xf32>
    %cst_19 = arith.constant 5.000000e-01 : f32
    %34 = vector.broadcast %cst_19 : f32 to vector<4x32xf32>
    %35 = arith.mulf %34, %33 : vector<4x32xf32>
    %36 = arith.addf %23, %26 : vector<4x32xf32>
    %cst_20 = arith.constant 5.000000e-01 : f32
    %37 = vector.broadcast %cst_20 : f32 to vector<4x32xf32>
    %38 = arith.mulf %37, %36 : vector<4x32xf32>
    %39 = math.tanh %38 : vector<4x32xf32>
    %cst_21 = arith.constant 1.000000e+00 : f32
    %40 = vector.broadcast %cst_21 : f32 to vector<4x32xf32>
    %41 = arith.addf %39, %40 : vector<4x32xf32>
    %cst_22 = arith.constant 5.000000e-01 : f32
    %42 = vector.broadcast %cst_22 : f32 to vector<4x32xf32>
    %43 = arith.mulf %42, %41 : vector<4x32xf32>
    %44 = arith.mulf %35, %27 : vector<4x32xf32>
    %45 = arith.addf %24, %44 : vector<4x32xf32>
    %46 = math.tanh %45 : vector<4x32xf32>
    %cst_23 = arith.constant 1.000000e+00 : f32
    %47 = vector.broadcast %cst_23 : f32 to vector<4x32xf32>
    %48 = arith.subf %47, %43 : vector<4x32xf32>
    %49 = arith.mulf %48, %46 : vector<4x32xf32>
    %50 = arith.mulf %43, %5 : vector<4x32xf32>
    %51 = arith.addf %49, %50 : vector<4x32xf32>
    %52 = vector.extract_strided_slice %14 {offsets = [0, 96], sizes = [4, 96], strides = [1, 1]} : vector<4x192xf32> to vector<4x96xf32>
    %53 = vector.extract_strided_slice %52 {offsets = [0, 0], sizes = [4, 32], strides = [1, 1]} : vector<4x96xf32> to vector<4x32xf32>
    %54 = vector.extract_strided_slice %52 {offsets = [0, 32], sizes = [4, 32], strides = [1, 1]} : vector<4x96xf32> to vector<4x32xf32>
    %55 = vector.extract_strided_slice %52 {offsets = [0, 64], sizes = [4, 32], strides = [1, 1]} : vector<4x96xf32> to vector<4x32xf32>
    %56 = vector.extract_strided_slice %20 {offsets = [0, 0], sizes = [4, 32], strides = [1, 1]} : vector<4x96xf32> to vector<4x32xf32>
    %57 = vector.extract_strided_slice %20 {offsets = [0, 32], sizes = [4, 32], strides = [1, 1]} : vector<4x96xf32> to vector<4x32xf32>
    %58 = vector.extract_strided_slice %20 {offsets = [0, 64], sizes = [4, 32], strides = [1, 1]} : vector<4x96xf32> to vector<4x32xf32>
    %59 = arith.addf %53, %56 : vector<4x32xf32>
    %cst_24 = arith.constant 5.000000e-01 : f32
    %60 = vector.broadcast %cst_24 : f32 to vector<4x32xf32>
    %61 = arith.mulf %60, %59 : vector<4x32xf32>
    %62 = math.tanh %61 : vector<4x32xf32>
    %cst_25 = arith.constant 1.000000e+00 : f32
    %63 = vector.broadcast %cst_25 : f32 to vector<4x32xf32>
    %64 = arith.addf %62, %63 : vector<4x32xf32>
    %cst_26 = arith.constant 5.000000e-01 : f32
    %65 = vector.broadcast %cst_26 : f32 to vector<4x32xf32>
    %66 = arith.mulf %65, %64 : vector<4x32xf32>
    %67 = arith.addf %54, %57 : vector<4x32xf32>
    %cst_27 = arith.constant 5.000000e-01 : f32
    %68 = vector.broadcast %cst_27 : f32 to vector<4x32xf32>
    %69 = arith.mulf %68, %67 : vector<4x32xf32>
    %70 = math.tanh %69 : vector<4x32xf32>
    %cst_28 = arith.constant 1.000000e+00 : f32
    %71 = vector.broadcast %cst_28 : f32 to vector<4x32xf32>
    %72 = arith.addf %70, %71 : vector<4x32xf32>
    %cst_29 = arith.constant 5.000000e-01 : f32
    %73 = vector.broadcast %cst_29 : f32 to vector<4x32xf32>
    %74 = arith.mulf %73, %72 : vector<4x32xf32>
    %75 = arith.mulf %66, %58 : vector<4x32xf32>
    %76 = arith.addf %55, %75 : vector<4x32xf32>
    %77 = math.tanh %76 : vector<4x32xf32>
    %cst_30 = arith.constant 1.000000e+00 : f32
    %78 = vector.broadcast %cst_30 : f32 to vector<4x32xf32>
    %79 = arith.subf %78, %74 : vector<4x32xf32>
    %80 = arith.mulf %79, %77 : vector<4x32xf32>
    %81 = arith.mulf %74, %7 : vector<4x32xf32>
    %82 = arith.addf %80, %81 : vector<4x32xf32>
    %83 = arith.index_cast %c0_i32 : i32 to index
    %c0_31 = arith.constant 0 : index
    %c0_32 = arith.constant 0 : index
    %84 = vector.load %arg6[%83, %c0_31, %c0_32] : memref<8x4x32xf32, #tpu.memory_space<vmem>>, vector<1x4x32xf32>
    %85 = vector.shape_cast %84 : vector<1x4x32xf32> to vector<4x32xf32>
    %86 = vector.shape_cast %51 : vector<4x32xf32> to vector<1x4x32xf32>
    tpu.vector_store %arg6[%83, %c0_31, %c0_32], %86 {strides = array<i32>} : memref<8x4x32xf32, #tpu.memory_space<vmem>>, vector<1x4x32xf32>,
    %87 = arith.index_cast %8 : i32 to index
    %c0_33 = arith.constant 0 : index
    %c0_34 = arith.constant 0 : index
    %88 = vector.load %arg7[%87, %c0_33, %c0_34] : memref<8x4x32xf32, #tpu.memory_space<vmem>>, vector<1x4x32xf32>
    %89 = vector.shape_cast %88 : vector<1x4x32xf32> to vector<4x32xf32>
    %90 = vector.shape_cast %82 : vector<4x32xf32> to vector<1x4x32xf32>
    tpu.vector_store %arg7[%87, %c0_33, %c0_34], %90 {strides = array<i32>} : memref<8x4x32xf32, #tpu.memory_space<vmem>>, vector<1x4x32xf32>,
    %c1_i32 = arith.constant 1 : i32
    %c7_i32_35 = arith.constant 7 : i32
    %91 = arith.subi %c7_i32_35, %c1_i32 : i32
    %92 = arith.index_cast %c1_i32 : i32 to index
    %c0_36 = arith.constant 0 : index
    %c0_37 = arith.constant 0 : index
    %93 = vector.load %arg0[%92, %c0_36, %c0_37] : memref<8x4x192xf32, #tpu.memory_space<vmem>>, vector<1x4x192xf32>
    %94 = vector.shape_cast %93 : vector<1x4x192xf32> to vector<4x192xf32>
    %95 = arith.index_cast %91 : i32 to index
    %c0_38 = arith.constant 0 : index
    %c0_39 = arith.constant 0 : index
    %96 = vector.load %arg0[%95, %c0_38, %c0_39] : memref<8x4x192xf32, #tpu.memory_space<vmem>>, vector<1x4x192xf32>
    %97 = vector.shape_cast %96 : vector<1x4x192xf32> to vector<4x192xf32>
    %cst_40 = arith.constant dense<0.000000e+00> : vector<4x96xf32>
    %98 = tpu.matmul %51, %0, %cst_40 {dimension_numbers = #tpu.dot_dimension_numbers<[1], [0], [0], [1], [0, 0, 1, 1], [], []>} : vector<4x32xf32>, vector<32x96xf32>, vector<4x96xf32> -> vector<4x96xf32>
    %99 = vector.broadcast %2 : vector<1x96xf32> to vector<4x96xf32>
    %100 = arith.addf %98, %99 : vector<4x96xf32>
    %cst_41 = arith.constant dense<0.000000e+00> : vector<4x96xf32>
    %101 = tpu.matmul %82, %1, %cst_41 {dimension_numbers = #tpu.dot_dimension_numbers<[1], [0], [0], [1], [0, 0, 1, 1], [], []>} : vector<4x32xf32>, vector<32x96xf32>, vector<4x96xf32> -> vector<4x96xf32>
    %102 = vector.broadcast %3 : vector<1x96xf32> to vector<4x96xf32>
    %103 = arith.addf %101, %102 : vector<4x96xf32>
    %104 = vector.extract_strided_slice %94 {offsets = [0, 0], sizes = [4, 96], strides = [1, 1]} : vector<4x192xf32> to vector<4x96xf32>
    %105 = vector.extract_strided_slice %104 {offsets = [0, 0], sizes = [4, 32], strides = [1, 1]} : vector<4x96xf32> to vector<4x32xf32>
    %106 = vector.extract_strided_slice %104 {offsets = [0, 32], sizes = [4, 32], strides = [1, 1]} : vector<4x96xf32> to vector<4x32xf32>
    %107 = vector.extract_strided_slice %104 {offsets = [0, 64], sizes = [4, 32], strides = [1, 1]} : vector<4x96xf32> to vector<4x32xf32>
    %108 = vector.extract_strided_slice %100 {offsets = [0, 0], sizes = [4, 32], strides = [1, 1]} : vector<4x96xf32> to vector<4x32xf32>
    %109 = vector.extract_strided_slice %100 {offsets = [0, 32], sizes = [4, 32], strides = [1, 1]} : vector<4x96xf32> to vector<4x32xf32>
    %110 = vector.extract_strided_slice %100 {offsets = [0, 64], sizes = [4, 32], strides = [1, 1]} : vector<4x96xf32> to vector<4x32xf32>
    %111 = arith.addf %105, %108 : vector<4x32xf32>
    %cst_42 = arith.constant 5.000000e-01 : f32
    %112 = vector.broadcast %cst_42 : f32 to vector<4x32xf32>
    %113 = arith.mulf %112, %111 : vector<4x32xf32>
    %114 = math.tanh %113 : vector<4x32xf32>
    %cst_43 = arith.constant 1.000000e+00 : f32
    %115 = vector.broadcast %cst_43 : f32 to vector<4x32xf32>
    %116 = arith.addf %114, %115 : vector<4x32xf32>
    %cst_44 = arith.constant 5.000000e-01 : f32
    %117 = vector.broadcast %cst_44 : f32 to vector<4x32xf32>
    %118 = arith.mulf %117, %116 : vector<4x32xf32>
    %119 = arith.addf %106, %109 : vector<4x32xf32>
    %cst_45 = arith.constant 5.000000e-01 : f32
    %120 = vector.broadcast %cst_45 : f32 to vector<4x32xf32>
    %121 = arith.mulf %120, %119 : vector<4x32xf32>
    %122 = math.tanh %121 : vector<4x32xf32>
    %cst_46 = arith.constant 1.000000e+00 : f32
    %123 = vector.broadcast %cst_46 : f32 to vector<4x32xf32>
    %124 = arith.addf %122, %123 : vector<4x32xf32>
    %cst_47 = arith.constant 5.000000e-01 : f32
    %125 = vector.broadcast %cst_47 : f32 to vector<4x32xf32>
    %126 = arith.mulf %125, %124 : vector<4x32xf32>
    %127 = arith.mulf %118, %110 : vector<4x32xf32>
    %128 = arith.addf %107, %127 : vector<4x32xf32>
    %129 = math.tanh %128 : vector<4x32xf32>
    %cst_48 = arith.constant 1.000000e+00 : f32
    %130 = vector.broadcast %cst_48 : f32 to vector<4x32xf32>
    %131 = arith.subf %130, %126 : vector<4x32xf32>
    %132 = arith.mulf %131, %129 : vector<4x32xf32>
    %133 = arith.mulf %126, %51 : vector<4x32xf32>
    %134 = arith.addf %132, %133 : vector<4x32xf32>
    %135 = vector.extract_strided_slice %97 {offsets = [0, 96], sizes = [4, 96], strides = [1, 1]} : vector<4x192xf32> to vector<4x96xf32>
    %136 = vector.extract_strided_slice %135 {offsets = [0, 0], sizes = [4, 32], strides = [1, 1]} : vector<4x96xf32> to vector<4x32xf32>
    %137 = vector.extract_strided_slice %135 {offsets = [0, 32], sizes = [4, 32], strides = [1, 1]} : vector<4x96xf32> to vector<4x32xf32>
    %138 = vector.extract_strided_slice %135 {offsets = [0, 64], sizes = [4, 32], strides = [1, 1]} : vector<4x96xf32> to vector<4x32xf32>
    %139 = vector.extract_strided_slice %103 {offsets = [0, 0], sizes = [4, 32], strides = [1, 1]} : vector<4x96xf32> to vector<4x32xf32>
    %140 = vector.extract_strided_slice %103 {offsets = [0, 32], sizes = [4, 32], strides = [1, 1]} : vector<4x96xf32> to vector<4x32xf32>
    %141 = vector.extract_strided_slice %103 {offsets = [0, 64], sizes = [4, 32], strides = [1, 1]} : vector<4x96xf32> to vector<4x32xf32>
    %142 = arith.addf %136, %139 : vector<4x32xf32>
    %cst_49 = arith.constant 5.000000e-01 : f32
    %143 = vector.broadcast %cst_49 : f32 to vector<4x32xf32>
    %144 = arith.mulf %143, %142 : vector<4x32xf32>
    %145 = math.tanh %144 : vector<4x32xf32>
    %cst_50 = arith.constant 1.000000e+00 : f32
    %146 = vector.broadcast %cst_50 : f32 to vector<4x32xf32>
    %147 = arith.addf %145, %146 : vector<4x32xf32>
    %cst_51 = arith.constant 5.000000e-01 : f32
    %148 = vector.broadcast %cst_51 : f32 to vector<4x32xf32>
    %149 = arith.mulf %148, %147 : vector<4x32xf32>
    %150 = arith.addf %137, %140 : vector<4x32xf32>
    %cst_52 = arith.constant 5.000000e-01 : f32
    %151 = vector.broadcast %cst_52 : f32 to vector<4x32xf32>
    %152 = arith.mulf %151, %150 : vector<4x32xf32>
    %153 = math.tanh %152 : vector<4x32xf32>
    %cst_53 = arith.constant 1.000000e+00 : f32
    %154 = vector.broadcast %cst_53 : f32 to vector<4x32xf32>
    %155 = arith.addf %153, %154 : vector<4x32xf32>
    %cst_54 = arith.constant 5.000000e-01 : f32
    %156 = vector.broadcast %cst_54 : f32 to vector<4x32xf32>
    %157 = arith.mulf %156, %155 : vector<4x32xf32>
    %158 = arith.mulf %149, %141 : vector<4x32xf32>
    %159 = arith.addf %138, %158 : vector<4x32xf32>
    %160 = math.tanh %159 : vector<4x32xf32>
    %cst_55 = arith.constant 1.000000e+00 : f32
    %161 = vector.broadcast %cst_55 : f32 to vector<4x32xf32>
    %162 = arith.subf %161, %157 : vector<4x32xf32>
    %163 = arith.mulf %162, %160 : vector<4x32xf32>
    %164 = arith.mulf %157, %82 : vector<4x32xf32>
    %165 = arith.addf %163, %164 : vector<4x32xf32>
    %166 = arith.index_cast %c1_i32 : i32 to index
    %c0_56 = arith.constant 0 : index
    %c0_57 = arith.constant 0 : index
    %167 = vector.load %arg6[%166, %c0_56, %c0_57] : memref<8x4x32xf32, #tpu.memory_space<vmem>>, vector<1x4x32xf32>
    %168 = vector.shape_cast %167 : vector<1x4x32xf32> to vector<4x32xf32>
    %169 = vector.shape_cast %134 : vector<4x32xf32> to vector<1x4x32xf32>
    tpu.vector_store %arg6[%166, %c0_56, %c0_57], %169 {strides = array<i32>} : memref<8x4x32xf32, #tpu.memory_space<vmem>>, vector<1x4x32xf32>,
    %170 = arith.index_cast %91 : i32 to index
    %c0_58 = arith.constant 0 : index
    %c0_59 = arith.constant 0 : index
    %171 = vector.load %arg7[%170, %c0_58, %c0_59] : memref<8x4x32xf32, #tpu.memory_space<vmem>>, vector<1x4x32xf32>
    %172 = vector.shape_cast %171 : vector<1x4x32xf32> to vector<4x32xf32>
    %173 = vector.shape_cast %165 : vector<4x32xf32> to vector<1x4x32xf32>
    tpu.vector_store %arg7[%170, %c0_58, %c0_59], %173 {strides = array<i32>} : memref<8x4x32xf32, #tpu.memory_space<vmem>>, vector<1x4x32xf32>,
    %c2_i32 = arith.constant 2 : i32
    %c7_i32_60 = arith.constant 7 : i32
    %174 = arith.subi %c7_i32_60, %c2_i32 : i32
    %175 = arith.index_cast %c2_i32 : i32 to index
    %c0_61 = arith.constant 0 : index
    %c0_62 = arith.constant 0 : index
    %176 = vector.load %arg0[%175, %c0_61, %c0_62] : memref<8x4x192xf32, #tpu.memory_space<vmem>>, vector<1x4x192xf32>
    %177 = vector.shape_cast %176 : vector<1x4x192xf32> to vector<4x192xf32>
    %178 = arith.index_cast %174 : i32 to index
    %c0_63 = arith.constant 0 : index
    %c0_64 = arith.constant 0 : index
    %179 = vector.load %arg0[%178, %c0_63, %c0_64] : memref<8x4x192xf32, #tpu.memory_space<vmem>>, vector<1x4x192xf32>
    %180 = vector.shape_cast %179 : vector<1x4x192xf32> to vector<4x192xf32>
    %cst_65 = arith.constant dense<0.000000e+00> : vector<4x96xf32>
    %181 = tpu.matmul %134, %0, %cst_65 {dimension_numbers = #tpu.dot_dimension_numbers<[1], [0], [0], [1], [0, 0, 1, 1], [], []>} : vector<4x32xf32>, vector<32x96xf32>, vector<4x96xf32> -> vector<4x96xf32>
    %182 = vector.broadcast %2 : vector<1x96xf32> to vector<4x96xf32>
    %183 = arith.addf %181, %182 : vector<4x96xf32>
    %cst_66 = arith.constant dense<0.000000e+00> : vector<4x96xf32>
    %184 = tpu.matmul %165, %1, %cst_66 {dimension_numbers = #tpu.dot_dimension_numbers<[1], [0], [0], [1], [0, 0, 1, 1], [], []>} : vector<4x32xf32>, vector<32x96xf32>, vector<4x96xf32> -> vector<4x96xf32>
    %185 = vector.broadcast %3 : vector<1x96xf32> to vector<4x96xf32>
    %186 = arith.addf %184, %185 : vector<4x96xf32>
    %187 = vector.extract_strided_slice %177 {offsets = [0, 0], sizes = [4, 96], strides = [1, 1]} : vector<4x192xf32> to vector<4x96xf32>
    %188 = vector.extract_strided_slice %187 {offsets = [0, 0], sizes = [4, 32], strides = [1, 1]} : vector<4x96xf32> to vector<4x32xf32>
    %189 = vector.extract_strided_slice %187 {offsets = [0, 32], sizes = [4, 32], strides = [1, 1]} : vector<4x96xf32> to vector<4x32xf32>
    %190 = vector.extract_strided_slice %187 {offsets = [0, 64], sizes = [4, 32], strides = [1, 1]} : vector<4x96xf32> to vector<4x32xf32>
    %191 = vector.extract_strided_slice %183 {offsets = [0, 0], sizes = [4, 32], strides = [1, 1]} : vector<4x96xf32> to vector<4x32xf32>
    %192 = vector.extract_strided_slice %183 {offsets = [0, 32], sizes = [4, 32], strides = [1, 1]} : vector<4x96xf32> to vector<4x32xf32>
    %193 = vector.extract_strided_slice %183 {offsets = [0, 64], sizes = [4, 32], strides = [1, 1]} : vector<4x96xf32> to vector<4x32xf32>
    %194 = arith.addf %188, %191 : vector<4x32xf32>
    %cst_67 = arith.constant 5.000000e-01 : f32
    %195 = vector.broadcast %cst_67 : f32 to vector<4x32xf32>
    %196 = arith.mulf %195, %194 : vector<4x32xf32>
    %197 = math.tanh %196 : vector<4x32xf32>
    %cst_68 = arith.constant 1.000000e+00 : f32
    %198 = vector.broadcast %cst_68 : f32 to vector<4x32xf32>
    %199 = arith.addf %197, %198 : vector<4x32xf32>
    %cst_69 = arith.constant 5.000000e-01 : f32
    %200 = vector.broadcast %cst_69 : f32 to vector<4x32xf32>
    %201 = arith.mulf %200, %199 : vector<4x32xf32>
    %202 = arith.addf %189, %192 : vector<4x32xf32>
    %cst_70 = arith.constant 5.000000e-01 : f32
    %203 = vector.broadcast %cst_70 : f32 to vector<4x32xf32>
    %204 = arith.mulf %203, %202 : vector<4x32xf32>
    %205 = math.tanh %204 : vector<4x32xf32>
    %cst_71 = arith.constant 1.000000e+00 : f32
    %206 = vector.broadcast %cst_71 : f32 to vector<4x32xf32>
    %207 = arith.addf %205, %206 : vector<4x32xf32>
    %cst_72 = arith.constant 5.000000e-01 : f32
    %208 = vector.broadcast %cst_72 : f32 to vector<4x32xf32>
    %209 = arith.mulf %208, %207 : vector<4x32xf32>
    %210 = arith.mulf %201, %193 : vector<4x32xf32>
    %211 = arith.addf %190, %210 : vector<4x32xf32>
    %212 = math.tanh %211 : vector<4x32xf32>
    %cst_73 = arith.constant 1.000000e+00 : f32
    %213 = vector.broadcast %cst_73 : f32 to vector<4x32xf32>
    %214 = arith.subf %213, %209 : vector<4x32xf32>
    %215 = arith.mulf %214, %212 : vector<4x32xf32>
    %216 = arith.mulf %209, %134 : vector<4x32xf32>
    %217 = arith.addf %215, %216 : vector<4x32xf32>
    %218 = vector.extract_strided_slice %180 {offsets = [0, 96], sizes = [4, 96], strides = [1, 1]} : vector<4x192xf32> to vector<4x96xf32>
    %219 = vector.extract_strided_slice %218 {offsets = [0, 0], sizes = [4, 32], strides = [1, 1]} : vector<4x96xf32> to vector<4x32xf32>
    %220 = vector.extract_strided_slice %218 {offsets = [0, 32], sizes = [4, 32], strides = [1, 1]} : vector<4x96xf32> to vector<4x32xf32>
    %221 = vector.extract_strided_slice %218 {offsets = [0, 64], sizes = [4, 32], strides = [1, 1]} : vector<4x96xf32> to vector<4x32xf32>
    %222 = vector.extract_strided_slice %186 {offsets = [0, 0], sizes = [4, 32], strides = [1, 1]} : vector<4x96xf32> to vector<4x32xf32>
    %223 = vector.extract_strided_slice %186 {offsets = [0, 32], sizes = [4, 32], strides = [1, 1]} : vector<4x96xf32> to vector<4x32xf32>
    %224 = vector.extract_strided_slice %186 {offsets = [0, 64], sizes = [4, 32], strides = [1, 1]} : vector<4x96xf32> to vector<4x32xf32>
    %225 = arith.addf %219, %222 : vector<4x32xf32>
    %cst_74 = arith.constant 5.000000e-01 : f32
    %226 = vector.broadcast %cst_74 : f32 to vector<4x32xf32>
    %227 = arith.mulf %226, %225 : vector<4x32xf32>
    %228 = math.tanh %227 : vector<4x32xf32>
    %cst_75 = arith.constant 1.000000e+00 : f32
    %229 = vector.broadcast %cst_75 : f32 to vector<4x32xf32>
    %230 = arith.addf %228, %229 : vector<4x32xf32>
    %cst_76 = arith.constant 5.000000e-01 : f32
    %231 = vector.broadcast %cst_76 : f32 to vector<4x32xf32>
    %232 = arith.mulf %231, %230 : vector<4x32xf32>
    %233 = arith.addf %220, %223 : vector<4x32xf32>
    %cst_77 = arith.constant 5.000000e-01 : f32
    %234 = vector.broadcast %cst_77 : f32 to vector<4x32xf32>
    %235 = arith.mulf %234, %233 : vector<4x32xf32>
    %236 = math.tanh %235 : vector<4x32xf32>
    %cst_78 = arith.constant 1.000000e+00 : f32
    %237 = vector.broadcast %cst_78 : f32 to vector<4x32xf32>
    %238 = arith.addf %236, %237 : vector<4x32xf32>
    %cst_79 = arith.constant 5.000000e-01 : f32
    %239 = vector.broadcast %cst_79 : f32 to vector<4x32xf32>
    %240 = arith.mulf %239, %238 : vector<4x32xf32>
    %241 = arith.mulf %232, %224 : vector<4x32xf32>
    %242 = arith.addf %221, %241 : vector<4x32xf32>
    %243 = math.tanh %242 : vector<4x32xf32>
    %cst_80 = arith.constant 1.000000e+00 : f32
    %244 = vector.broadcast %cst_80 : f32 to vector<4x32xf32>
    %245 = arith.subf %244, %240 : vector<4x32xf32>
    %246 = arith.mulf %245, %243 : vector<4x32xf32>
    %247 = arith.mulf %240, %165 : vector<4x32xf32>
    %248 = arith.addf %246, %247 : vector<4x32xf32>
    %249 = arith.index_cast %c2_i32 : i32 to index
    %c0_81 = arith.constant 0 : index
    %c0_82 = arith.constant 0 : index
    %250 = vector.load %arg6[%249, %c0_81, %c0_82] : memref<8x4x32xf32, #tpu.memory_space<vmem>>, vector<1x4x32xf32>
    %251 = vector.shape_cast %250 : vector<1x4x32xf32> to vector<4x32xf32>
    %252 = vector.shape_cast %217 : vector<4x32xf32> to vector<1x4x32xf32>
    tpu.vector_store %arg6[%249, %c0_81, %c0_82], %252 {strides = array<i32>} : memref<8x4x32xf32, #tpu.memory_space<vmem>>, vector<1x4x32xf32>,
    %253 = arith.index_cast %174 : i32 to index
    %c0_83 = arith.constant 0 : index
    %c0_84 = arith.constant 0 : index
    %254 = vector.load %arg7[%253, %c0_83, %c0_84] : memref<8x4x32xf32, #tpu.memory_space<vmem>>, vector<1x4x32xf32>
    %255 = vector.shape_cast %254 : vector<1x4x32xf32> to vector<4x32xf32>
    %256 = vector.shape_cast %248 : vector<4x32xf32> to vector<1x4x32xf32>
    tpu.vector_store %arg7[%253, %c0_83, %c0_84], %256 {strides = array<i32>} : memref<8x4x32xf32, #tpu.memory_space<vmem>>, vector<1x4x32xf32>,
    %c3_i32 = arith.constant 3 : i32
    %c7_i32_85 = arith.constant 7 : i32
    %257 = arith.subi %c7_i32_85, %c3_i32 : i32
    %258 = arith.index_cast %c3_i32 : i32 to index
    %c0_86 = arith.constant 0 : index
    %c0_87 = arith.constant 0 : index
    %259 = vector.load %arg0[%258, %c0_86, %c0_87] : memref<8x4x192xf32, #tpu.memory_space<vmem>>, vector<1x4x192xf32>
    %260 = vector.shape_cast %259 : vector<1x4x192xf32> to vector<4x192xf32>
    %261 = arith.index_cast %257 : i32 to index
    %c0_88 = arith.constant 0 : index
    %c0_89 = arith.constant 0 : index
    %262 = vector.load %arg0[%261, %c0_88, %c0_89] : memref<8x4x192xf32, #tpu.memory_space<vmem>>, vector<1x4x192xf32>
    %263 = vector.shape_cast %262 : vector<1x4x192xf32> to vector<4x192xf32>
    %cst_90 = arith.constant dense<0.000000e+00> : vector<4x96xf32>
    %264 = tpu.matmul %217, %0, %cst_90 {dimension_numbers = #tpu.dot_dimension_numbers<[1], [0], [0], [1], [0, 0, 1, 1], [], []>} : vector<4x32xf32>, vector<32x96xf32>, vector<4x96xf32> -> vector<4x96xf32>
    %265 = vector.broadcast %2 : vector<1x96xf32> to vector<4x96xf32>
    %266 = arith.addf %264, %265 : vector<4x96xf32>
    %cst_91 = arith.constant dense<0.000000e+00> : vector<4x96xf32>
    %267 = tpu.matmul %248, %1, %cst_91 {dimension_numbers = #tpu.dot_dimension_numbers<[1], [0], [0], [1], [0, 0, 1, 1], [], []>} : vector<4x32xf32>, vector<32x96xf32>, vector<4x96xf32> -> vector<4x96xf32>
    %268 = vector.broadcast %3 : vector<1x96xf32> to vector<4x96xf32>
    %269 = arith.addf %267, %268 : vector<4x96xf32>
    %270 = vector.extract_strided_slice %260 {offsets = [0, 0], sizes = [4, 96], strides = [1, 1]} : vector<4x192xf32> to vector<4x96xf32>
    %271 = vector.extract_strided_slice %270 {offsets = [0, 0], sizes = [4, 32], strides = [1, 1]} : vector<4x96xf32> to vector<4x32xf32>
    %272 = vector.extract_strided_slice %270 {offsets = [0, 32], sizes = [4, 32], strides = [1, 1]} : vector<4x96xf32> to vector<4x32xf32>
    %273 = vector.extract_strided_slice %270 {offsets = [0, 64], sizes = [4, 32], strides = [1, 1]} : vector<4x96xf32> to vector<4x32xf32>
    %274 = vector.extract_strided_slice %266 {offsets = [0, 0], sizes = [4, 32], strides = [1, 1]} : vector<4x96xf32> to vector<4x32xf32>
    %275 = vector.extract_strided_slice %266 {offsets = [0, 32], sizes = [4, 32], strides = [1, 1]} : vector<4x96xf32> to vector<4x32xf32>
    %276 = vector.extract_strided_slice %266 {offsets = [0, 64], sizes = [4, 32], strides = [1, 1]} : vector<4x96xf32> to vector<4x32xf32>
    %277 = arith.addf %271, %274 : vector<4x32xf32>
    %cst_92 = arith.constant 5.000000e-01 : f32
    %278 = vector.broadcast %cst_92 : f32 to vector<4x32xf32>
    %279 = arith.mulf %278, %277 : vector<4x32xf32>
    %280 = math.tanh %279 : vector<4x32xf32>
    %cst_93 = arith.constant 1.000000e+00 : f32
    %281 = vector.broadcast %cst_93 : f32 to vector<4x32xf32>
    %282 = arith.addf %280, %281 : vector<4x32xf32>
    %cst_94 = arith.constant 5.000000e-01 : f32
    %283 = vector.broadcast %cst_94 : f32 to vector<4x32xf32>
    %284 = arith.mulf %283, %282 : vector<4x32xf32>
    %285 = arith.addf %272, %275 : vector<4x32xf32>
    %cst_95 = arith.constant 5.000000e-01 : f32
    %286 = vector.broadcast %cst_95 : f32 to vector<4x32xf32>
    %287 = arith.mulf %286, %285 : vector<4x32xf32>
    %288 = math.tanh %287 : vector<4x32xf32>
    %cst_96 = arith.constant 1.000000e+00 : f32
    %289 = vector.broadcast %cst_96 : f32 to vector<4x32xf32>
    %290 = arith.addf %288, %289 : vector<4x32xf32>
    %cst_97 = arith.constant 5.000000e-01 : f32
    %291 = vector.broadcast %cst_97 : f32 to vector<4x32xf32>
    %292 = arith.mulf %291, %290 : vector<4x32xf32>
    %293 = arith.mulf %284, %276 : vector<4x32xf32>
    %294 = arith.addf %273, %293 : vector<4x32xf32>
    %295 = math.tanh %294 : vector<4x32xf32>
    %cst_98 = arith.constant 1.000000e+00 : f32
    %296 = vector.broadcast %cst_98 : f32 to vector<4x32xf32>
    %297 = arith.subf %296, %292 : vector<4x32xf32>
    %298 = arith.mulf %297, %295 : vector<4x32xf32>
    %299 = arith.mulf %292, %217 : vector<4x32xf32>
    %300 = arith.addf %298, %299 : vector<4x32xf32>
    %301 = vector.extract_strided_slice %263 {offsets = [0, 96], sizes = [4, 96], strides = [1, 1]} : vector<4x192xf32> to vector<4x96xf32>
    %302 = vector.extract_strided_slice %301 {offsets = [0, 0], sizes = [4, 32], strides = [1, 1]} : vector<4x96xf32> to vector<4x32xf32>
    %303 = vector.extract_strided_slice %301 {offsets = [0, 32], sizes = [4, 32], strides = [1, 1]} : vector<4x96xf32> to vector<4x32xf32>
    %304 = vector.extract_strided_slice %301 {offsets = [0, 64], sizes = [4, 32], strides = [1, 1]} : vector<4x96xf32> to vector<4x32xf32>
    %305 = vector.extract_strided_slice %269 {offsets = [0, 0], sizes = [4, 32], strides = [1, 1]} : vector<4x96xf32> to vector<4x32xf32>
    %306 = vector.extract_strided_slice %269 {offsets = [0, 32], sizes = [4, 32], strides = [1, 1]} : vector<4x96xf32> to vector<4x32xf32>
    %307 = vector.extract_strided_slice %269 {offsets = [0, 64], sizes = [4, 32], strides = [1, 1]} : vector<4x96xf32> to vector<4x32xf32>
    %308 = arith.addf %302, %305 : vector<4x32xf32>
    %cst_99 = arith.constant 5.000000e-01 : f32
    %309 = vector.broadcast %cst_99 : f32 to vector<4x32xf32>
    %310 = arith.mulf %309, %308 : vector<4x32xf32>
    %311 = math.tanh %310 : vector<4x32xf32>
    %cst_100 = arith.constant 1.000000e+00 : f32
    %312 = vector.broadcast %cst_100 : f32 to vector<4x32xf32>
    %313 = arith.addf %311, %312 : vector<4x32xf32>
    %cst_101 = arith.constant 5.000000e-01 : f32
    %314 = vector.broadcast %cst_101 : f32 to vector<4x32xf32>
    %315 = arith.mulf %314, %313 : vector<4x32xf32>
    %316 = arith.addf %303, %306 : vector<4x32xf32>
    %cst_102 = arith.constant 5.000000e-01 : f32
    %317 = vector.broadcast %cst_102 : f32 to vector<4x32xf32>
    %318 = arith.mulf %317, %316 : vector<4x32xf32>
    %319 = math.tanh %318 : vector<4x32xf32>
    %cst_103 = arith.constant 1.000000e+00 : f32
    %320 = vector.broadcast %cst_103 : f32 to vector<4x32xf32>
    %321 = arith.addf %319, %320 : vector<4x32xf32>
    %cst_104 = arith.constant 5.000000e-01 : f32
    %322 = vector.broadcast %cst_104 : f32 to vector<4x32xf32>
    %323 = arith.mulf %322, %321 : vector<4x32xf32>
    %324 = arith.mulf %315, %307 : vector<4x32xf32>
    %325 = arith.addf %304, %324 : vector<4x32xf32>
    %326 = math.tanh %325 : vector<4x32xf32>
    %cst_105 = arith.constant 1.000000e+00 : f32
    %327 = vector.broadcast %cst_105 : f32 to vector<4x32xf32>
    %328 = arith.subf %327, %323 : vector<4x32xf32>
    %329 = arith.mulf %328, %326 : vector<4x32xf32>
    %330 = arith.mulf %323, %248 : vector<4x32xf32>
    %331 = arith.addf %329, %330 : vector<4x32xf32>
    %332 = arith.index_cast %c3_i32 : i32 to index
    %c0_106 = arith.constant 0 : index
    %c0_107 = arith.constant 0 : index
    %333 = vector.load %arg6[%332, %c0_106, %c0_107] : memref<8x4x32xf32, #tpu.memory_space<vmem>>, vector<1x4x32xf32>
    %334 = vector.shape_cast %333 : vector<1x4x32xf32> to vector<4x32xf32>
    %335 = vector.shape_cast %300 : vector<4x32xf32> to vector<1x4x32xf32>
    tpu.vector_store %arg6[%332, %c0_106, %c0_107], %335 {strides = array<i32>} : memref<8x4x32xf32, #tpu.memory_space<vmem>>, vector<1x4x32xf32>,
    %336 = arith.index_cast %257 : i32 to index
    %c0_108 = arith.constant 0 : index
    %c0_109 = arith.constant 0 : index
    %337 = vector.load %arg7[%336, %c0_108, %c0_109] : memref<8x4x32xf32, #tpu.memory_space<vmem>>, vector<1x4x32xf32>
    %338 = vector.shape_cast %337 : vector<1x4x32xf32> to vector<4x32xf32>
    %339 = vector.shape_cast %331 : vector<4x32xf32> to vector<1x4x32xf32>
    tpu.vector_store %arg7[%336, %c0_108, %c0_109], %339 {strides = array<i32>} : memref<8x4x32xf32, #tpu.memory_space<vmem>>, vector<1x4x32xf32>,
    %c4_i32 = arith.constant 4 : i32
    %c7_i32_110 = arith.constant 7 : i32
    %340 = arith.subi %c7_i32_110, %c4_i32 : i32
    %341 = arith.index_cast %c4_i32 : i32 to index
    %c0_111 = arith.constant 0 : index
    %c0_112 = arith.constant 0 : index
    %342 = vector.load %arg0[%341, %c0_111, %c0_112] : memref<8x4x192xf32, #tpu.memory_space<vmem>>, vector<1x4x192xf32>
    %343 = vector.shape_cast %342 : vector<1x4x192xf32> to vector<4x192xf32>
    %344 = arith.index_cast %340 : i32 to index
    %c0_113 = arith.constant 0 : index
    %c0_114 = arith.constant 0 : index
    %345 = vector.load %arg0[%344, %c0_113, %c0_114] : memref<8x4x192xf32, #tpu.memory_space<vmem>>, vector<1x4x192xf32>
    %346 = vector.shape_cast %345 : vector<1x4x192xf32> to vector<4x192xf32>
    %cst_115 = arith.constant dense<0.000000e+00> : vector<4x96xf32>
    %347 = tpu.matmul %300, %0, %cst_115 {dimension_numbers = #tpu.dot_dimension_numbers<[1], [0], [0], [1], [0, 0, 1, 1], [], []>} : vector<4x32xf32>, vector<32x96xf32>, vector<4x96xf32> -> vector<4x96xf32>
    %348 = vector.broadcast %2 : vector<1x96xf32> to vector<4x96xf32>
    %349 = arith.addf %347, %348 : vector<4x96xf32>
    %cst_116 = arith.constant dense<0.000000e+00> : vector<4x96xf32>
    %350 = tpu.matmul %331, %1, %cst_116 {dimension_numbers = #tpu.dot_dimension_numbers<[1], [0], [0], [1], [0, 0, 1, 1], [], []>} : vector<4x32xf32>, vector<32x96xf32>, vector<4x96xf32> -> vector<4x96xf32>
    %351 = vector.broadcast %3 : vector<1x96xf32> to vector<4x96xf32>
    %352 = arith.addf %350, %351 : vector<4x96xf32>
    %353 = vector.extract_strided_slice %343 {offsets = [0, 0], sizes = [4, 96], strides = [1, 1]} : vector<4x192xf32> to vector<4x96xf32>
    %354 = vector.extract_strided_slice %353 {offsets = [0, 0], sizes = [4, 32], strides = [1, 1]} : vector<4x96xf32> to vector<4x32xf32>
    %355 = vector.extract_strided_slice %353 {offsets = [0, 32], sizes = [4, 32], strides = [1, 1]} : vector<4x96xf32> to vector<4x32xf32>
    %356 = vector.extract_strided_slice %353 {offsets = [0, 64], sizes = [4, 32], strides = [1, 1]} : vector<4x96xf32> to vector<4x32xf32>
    %357 = vector.extract_strided_slice %349 {offsets = [0, 0], sizes = [4, 32], strides = [1, 1]} : vector<4x96xf32> to vector<4x32xf32>
    %358 = vector.extract_strided_slice %349 {offsets = [0, 32], sizes = [4, 32], strides = [1, 1]} : vector<4x96xf32> to vector<4x32xf32>
    %359 = vector.extract_strided_slice %349 {offsets = [0, 64], sizes = [4, 32], strides = [1, 1]} : vector<4x96xf32> to vector<4x32xf32>
    %360 = arith.addf %354, %357 : vector<4x32xf32>
    %cst_117 = arith.constant 5.000000e-01 : f32
    %361 = vector.broadcast %cst_117 : f32 to vector<4x32xf32>
    %362 = arith.mulf %361, %360 : vector<4x32xf32>
    %363 = math.tanh %362 : vector<4x32xf32>
    %cst_118 = arith.constant 1.000000e+00 : f32
    %364 = vector.broadcast %cst_118 : f32 to vector<4x32xf32>
    %365 = arith.addf %363, %364 : vector<4x32xf32>
    %cst_119 = arith.constant 5.000000e-01 : f32
    %366 = vector.broadcast %cst_119 : f32 to vector<4x32xf32>
    %367 = arith.mulf %366, %365 : vector<4x32xf32>
    %368 = arith.addf %355, %358 : vector<4x32xf32>
    %cst_120 = arith.constant 5.000000e-01 : f32
    %369 = vector.broadcast %cst_120 : f32 to vector<4x32xf32>
    %370 = arith.mulf %369, %368 : vector<4x32xf32>
    %371 = math.tanh %370 : vector<4x32xf32>
    %cst_121 = arith.constant 1.000000e+00 : f32
    %372 = vector.broadcast %cst_121 : f32 to vector<4x32xf32>
    %373 = arith.addf %371, %372 : vector<4x32xf32>
    %cst_122 = arith.constant 5.000000e-01 : f32
    %374 = vector.broadcast %cst_122 : f32 to vector<4x32xf32>
    %375 = arith.mulf %374, %373 : vector<4x32xf32>
    %376 = arith.mulf %367, %359 : vector<4x32xf32>
    %377 = arith.addf %356, %376 : vector<4x32xf32>
    %378 = math.tanh %377 : vector<4x32xf32>
    %cst_123 = arith.constant 1.000000e+00 : f32
    %379 = vector.broadcast %cst_123 : f32 to vector<4x32xf32>
    %380 = arith.subf %379, %375 : vector<4x32xf32>
    %381 = arith.mulf %380, %378 : vector<4x32xf32>
    %382 = arith.mulf %375, %300 : vector<4x32xf32>
    %383 = arith.addf %381, %382 : vector<4x32xf32>
    %384 = vector.extract_strided_slice %346 {offsets = [0, 96], sizes = [4, 96], strides = [1, 1]} : vector<4x192xf32> to vector<4x96xf32>
    %385 = vector.extract_strided_slice %384 {offsets = [0, 0], sizes = [4, 32], strides = [1, 1]} : vector<4x96xf32> to vector<4x32xf32>
    %386 = vector.extract_strided_slice %384 {offsets = [0, 32], sizes = [4, 32], strides = [1, 1]} : vector<4x96xf32> to vector<4x32xf32>
    %387 = vector.extract_strided_slice %384 {offsets = [0, 64], sizes = [4, 32], strides = [1, 1]} : vector<4x96xf32> to vector<4x32xf32>
    %388 = vector.extract_strided_slice %352 {offsets = [0, 0], sizes = [4, 32], strides = [1, 1]} : vector<4x96xf32> to vector<4x32xf32>
    %389 = vector.extract_strided_slice %352 {offsets = [0, 32], sizes = [4, 32], strides = [1, 1]} : vector<4x96xf32> to vector<4x32xf32>
    %390 = vector.extract_strided_slice %352 {offsets = [0, 64], sizes = [4, 32], strides = [1, 1]} : vector<4x96xf32> to vector<4x32xf32>
    %391 = arith.addf %385, %388 : vector<4x32xf32>
    %cst_124 = arith.constant 5.000000e-01 : f32
    %392 = vector.broadcast %cst_124 : f32 to vector<4x32xf32>
    %393 = arith.mulf %392, %391 : vector<4x32xf32>
    %394 = math.tanh %393 : vector<4x32xf32>
    %cst_125 = arith.constant 1.000000e+00 : f32
    %395 = vector.broadcast %cst_125 : f32 to vector<4x32xf32>
    %396 = arith.addf %394, %395 : vector<4x32xf32>
    %cst_126 = arith.constant 5.000000e-01 : f32
    %397 = vector.broadcast %cst_126 : f32 to vector<4x32xf32>
    %398 = arith.mulf %397, %396 : vector<4x32xf32>
    %399 = arith.addf %386, %389 : vector<4x32xf32>
    %cst_127 = arith.constant 5.000000e-01 : f32
    %400 = vector.broadcast %cst_127 : f32 to vector<4x32xf32>
    %401 = arith.mulf %400, %399 : vector<4x32xf32>
    %402 = math.tanh %401 : vector<4x32xf32>
    %cst_128 = arith.constant 1.000000e+00 : f32
    %403 = vector.broadcast %cst_128 : f32 to vector<4x32xf32>
    %404 = arith.addf %402, %403 : vector<4x32xf32>
    %cst_129 = arith.constant 5.000000e-01 : f32
    %405 = vector.broadcast %cst_129 : f32 to vector<4x32xf32>
    %406 = arith.mulf %405, %404 : vector<4x32xf32>
    %407 = arith.mulf %398, %390 : vector<4x32xf32>
    %408 = arith.addf %387, %407 : vector<4x32xf32>
    %409 = math.tanh %408 : vector<4x32xf32>
    %cst_130 = arith.constant 1.000000e+00 : f32
    %410 = vector.broadcast %cst_130 : f32 to vector<4x32xf32>
    %411 = arith.subf %410, %406 : vector<4x32xf32>
    %412 = arith.mulf %411, %409 : vector<4x32xf32>
    %413 = arith.mulf %406, %331 : vector<4x32xf32>
    %414 = arith.addf %412, %413 : vector<4x32xf32>
    %415 = arith.index_cast %c4_i32 : i32 to index
    %c0_131 = arith.constant 0 : index
    %c0_132 = arith.constant 0 : index
    %416 = vector.load %arg6[%415, %c0_131, %c0_132] : memref<8x4x32xf32, #tpu.memory_space<vmem>>, vector<1x4x32xf32>
    %417 = vector.shape_cast %416 : vector<1x4x32xf32> to vector<4x32xf32>
    %418 = vector.shape_cast %383 : vector<4x32xf32> to vector<1x4x32xf32>
    tpu.vector_store %arg6[%415, %c0_131, %c0_132], %418 {strides = array<i32>} : memref<8x4x32xf32, #tpu.memory_space<vmem>>, vector<1x4x32xf32>,
    %419 = arith.index_cast %340 : i32 to index
    %c0_133 = arith.constant 0 : index
    %c0_134 = arith.constant 0 : index
    %420 = vector.load %arg7[%419, %c0_133, %c0_134] : memref<8x4x32xf32, #tpu.memory_space<vmem>>, vector<1x4x32xf32>
    %421 = vector.shape_cast %420 : vector<1x4x32xf32> to vector<4x32xf32>
    %422 = vector.shape_cast %414 : vector<4x32xf32> to vector<1x4x32xf32>
    tpu.vector_store %arg7[%419, %c0_133, %c0_134], %422 {strides = array<i32>} : memref<8x4x32xf32, #tpu.memory_space<vmem>>, vector<1x4x32xf32>,
    %c5_i32 = arith.constant 5 : i32
    %c7_i32_135 = arith.constant 7 : i32
    %423 = arith.subi %c7_i32_135, %c5_i32 : i32
    %424 = arith.index_cast %c5_i32 : i32 to index
    %c0_136 = arith.constant 0 : index
    %c0_137 = arith.constant 0 : index
    %425 = vector.load %arg0[%424, %c0_136, %c0_137] : memref<8x4x192xf32, #tpu.memory_space<vmem>>, vector<1x4x192xf32>
    %426 = vector.shape_cast %425 : vector<1x4x192xf32> to vector<4x192xf32>
    %427 = arith.index_cast %423 : i32 to index
    %c0_138 = arith.constant 0 : index
    %c0_139 = arith.constant 0 : index
    %428 = vector.load %arg0[%427, %c0_138, %c0_139] : memref<8x4x192xf32, #tpu.memory_space<vmem>>, vector<1x4x192xf32>
    %429 = vector.shape_cast %428 : vector<1x4x192xf32> to vector<4x192xf32>
    %cst_140 = arith.constant dense<0.000000e+00> : vector<4x96xf32>
    %430 = tpu.matmul %383, %0, %cst_140 {dimension_numbers = #tpu.dot_dimension_numbers<[1], [0], [0], [1], [0, 0, 1, 1], [], []>} : vector<4x32xf32>, vector<32x96xf32>, vector<4x96xf32> -> vector<4x96xf32>
    %431 = vector.broadcast %2 : vector<1x96xf32> to vector<4x96xf32>
    %432 = arith.addf %430, %431 : vector<4x96xf32>
    %cst_141 = arith.constant dense<0.000000e+00> : vector<4x96xf32>
    %433 = tpu.matmul %414, %1, %cst_141 {dimension_numbers = #tpu.dot_dimension_numbers<[1], [0], [0], [1], [0, 0, 1, 1], [], []>} : vector<4x32xf32>, vector<32x96xf32>, vector<4x96xf32> -> vector<4x96xf32>
    %434 = vector.broadcast %3 : vector<1x96xf32> to vector<4x96xf32>
    %435 = arith.addf %433, %434 : vector<4x96xf32>
    %436 = vector.extract_strided_slice %426 {offsets = [0, 0], sizes = [4, 96], strides = [1, 1]} : vector<4x192xf32> to vector<4x96xf32>
    %437 = vector.extract_strided_slice %436 {offsets = [0, 0], sizes = [4, 32], strides = [1, 1]} : vector<4x96xf32> to vector<4x32xf32>
    %438 = vector.extract_strided_slice %436 {offsets = [0, 32], sizes = [4, 32], strides = [1, 1]} : vector<4x96xf32> to vector<4x32xf32>
    %439 = vector.extract_strided_slice %436 {offsets = [0, 64], sizes = [4, 32], strides = [1, 1]} : vector<4x96xf32> to vector<4x32xf32>
    %440 = vector.extract_strided_slice %432 {offsets = [0, 0], sizes = [4, 32], strides = [1, 1]} : vector<4x96xf32> to vector<4x32xf32>
    %441 = vector.extract_strided_slice %432 {offsets = [0, 32], sizes = [4, 32], strides = [1, 1]} : vector<4x96xf32> to vector<4x32xf32>
    %442 = vector.extract_strided_slice %432 {offsets = [0, 64], sizes = [4, 32], strides = [1, 1]} : vector<4x96xf32> to vector<4x32xf32>
    %443 = arith.addf %437, %440 : vector<4x32xf32>
    %cst_142 = arith.constant 5.000000e-01 : f32
    %444 = vector.broadcast %cst_142 : f32 to vector<4x32xf32>
    %445 = arith.mulf %444, %443 : vector<4x32xf32>
    %446 = math.tanh %445 : vector<4x32xf32>
    %cst_143 = arith.constant 1.000000e+00 : f32
    %447 = vector.broadcast %cst_143 : f32 to vector<4x32xf32>
    %448 = arith.addf %446, %447 : vector<4x32xf32>
    %cst_144 = arith.constant 5.000000e-01 : f32
    %449 = vector.broadcast %cst_144 : f32 to vector<4x32xf32>
    %450 = arith.mulf %449, %448 : vector<4x32xf32>
    %451 = arith.addf %438, %441 : vector<4x32xf32>
    %cst_145 = arith.constant 5.000000e-01 : f32
    %452 = vector.broadcast %cst_145 : f32 to vector<4x32xf32>
    %453 = arith.mulf %452, %451 : vector<4x32xf32>
    %454 = math.tanh %453 : vector<4x32xf32>
    %cst_146 = arith.constant 1.000000e+00 : f32
    %455 = vector.broadcast %cst_146 : f32 to vector<4x32xf32>
    %456 = arith.addf %454, %455 : vector<4x32xf32>
    %cst_147 = arith.constant 5.000000e-01 : f32
    %457 = vector.broadcast %cst_147 : f32 to vector<4x32xf32>
    %458 = arith.mulf %457, %456 : vector<4x32xf32>
    %459 = arith.mulf %450, %442 : vector<4x32xf32>
    %460 = arith.addf %439, %459 : vector<4x32xf32>
    %461 = math.tanh %460 : vector<4x32xf32>
    %cst_148 = arith.constant 1.000000e+00 : f32
    %462 = vector.broadcast %cst_148 : f32 to vector<4x32xf32>
    %463 = arith.subf %462, %458 : vector<4x32xf32>
    %464 = arith.mulf %463, %461 : vector<4x32xf32>
    %465 = arith.mulf %458, %383 : vector<4x32xf32>
    %466 = arith.addf %464, %465 : vector<4x32xf32>
    %467 = vector.extract_strided_slice %429 {offsets = [0, 96], sizes = [4, 96], strides = [1, 1]} : vector<4x192xf32> to vector<4x96xf32>
    %468 = vector.extract_strided_slice %467 {offsets = [0, 0], sizes = [4, 32], strides = [1, 1]} : vector<4x96xf32> to vector<4x32xf32>
    %469 = vector.extract_strided_slice %467 {offsets = [0, 32], sizes = [4, 32], strides = [1, 1]} : vector<4x96xf32> to vector<4x32xf32>
    %470 = vector.extract_strided_slice %467 {offsets = [0, 64], sizes = [4, 32], strides = [1, 1]} : vector<4x96xf32> to vector<4x32xf32>
    %471 = vector.extract_strided_slice %435 {offsets = [0, 0], sizes = [4, 32], strides = [1, 1]} : vector<4x96xf32> to vector<4x32xf32>
    %472 = vector.extract_strided_slice %435 {offsets = [0, 32], sizes = [4, 32], strides = [1, 1]} : vector<4x96xf32> to vector<4x32xf32>
    %473 = vector.extract_strided_slice %435 {offsets = [0, 64], sizes = [4, 32], strides = [1, 1]} : vector<4x96xf32> to vector<4x32xf32>
    %474 = arith.addf %468, %471 : vector<4x32xf32>
    %cst_149 = arith.constant 5.000000e-01 : f32
    %475 = vector.broadcast %cst_149 : f32 to vector<4x32xf32>
    %476 = arith.mulf %475, %474 : vector<4x32xf32>
    %477 = math.tanh %476 : vector<4x32xf32>
    %cst_150 = arith.constant 1.000000e+00 : f32
    %478 = vector.broadcast %cst_150 : f32 to vector<4x32xf32>
    %479 = arith.addf %477, %478 : vector<4x32xf32>
    %cst_151 = arith.constant 5.000000e-01 : f32
    %480 = vector.broadcast %cst_151 : f32 to vector<4x32xf32>
    %481 = arith.mulf %480, %479 : vector<4x32xf32>
    %482 = arith.addf %469, %472 : vector<4x32xf32>
    %cst_152 = arith.constant 5.000000e-01 : f32
    %483 = vector.broadcast %cst_152 : f32 to vector<4x32xf32>
    %484 = arith.mulf %483, %482 : vector<4x32xf32>
    %485 = math.tanh %484 : vector<4x32xf32>
    %cst_153 = arith.constant 1.000000e+00 : f32
    %486 = vector.broadcast %cst_153 : f32 to vector<4x32xf32>
    %487 = arith.addf %485, %486 : vector<4x32xf32>
    %cst_154 = arith.constant 5.000000e-01 : f32
    %488 = vector.broadcast %cst_154 : f32 to vector<4x32xf32>
    %489 = arith.mulf %488, %487 : vector<4x32xf32>
    %490 = arith.mulf %481, %473 : vector<4x32xf32>
    %491 = arith.addf %470, %490 : vector<4x32xf32>
    %492 = math.tanh %491 : vector<4x32xf32>
    %cst_155 = arith.constant 1.000000e+00 : f32
    %493 = vector.broadcast %cst_155 : f32 to vector<4x32xf32>
    %494 = arith.subf %493, %489 : vector<4x32xf32>
    %495 = arith.mulf %494, %492 : vector<4x32xf32>
    %496 = arith.mulf %489, %414 : vector<4x32xf32>
    %497 = arith.addf %495, %496 : vector<4x32xf32>
    %498 = arith.index_cast %c5_i32 : i32 to index
    %c0_156 = arith.constant 0 : index
    %c0_157 = arith.constant 0 : index
    %499 = vector.load %arg6[%498, %c0_156, %c0_157] : memref<8x4x32xf32, #tpu.memory_space<vmem>>, vector<1x4x32xf32>
    %500 = vector.shape_cast %499 : vector<1x4x32xf32> to vector<4x32xf32>
    %501 = vector.shape_cast %466 : vector<4x32xf32> to vector<1x4x32xf32>
    tpu.vector_store %arg6[%498, %c0_156, %c0_157], %501 {strides = array<i32>} : memref<8x4x32xf32, #tpu.memory_space<vmem>>, vector<1x4x32xf32>,
    %502 = arith.index_cast %423 : i32 to index
    %c0_158 = arith.constant 0 : index
    %c0_159 = arith.constant 0 : index
    %503 = vector.load %arg7[%502, %c0_158, %c0_159] : memref<8x4x32xf32, #tpu.memory_space<vmem>>, vector<1x4x32xf32>
    %504 = vector.shape_cast %503 : vector<1x4x32xf32> to vector<4x32xf32>
    %505 = vector.shape_cast %497 : vector<4x32xf32> to vector<1x4x32xf32>
    tpu.vector_store %arg7[%502, %c0_158, %c0_159], %505 {strides = array<i32>} : memref<8x4x32xf32, #tpu.memory_space<vmem>>, vector<1x4x32xf32>,
    %c6_i32 = arith.constant 6 : i32
    %c7_i32_160 = arith.constant 7 : i32
    %506 = arith.subi %c7_i32_160, %c6_i32 : i32
    %507 = arith.index_cast %c6_i32 : i32 to index
    %c0_161 = arith.constant 0 : index
    %c0_162 = arith.constant 0 : index
    %508 = vector.load %arg0[%507, %c0_161, %c0_162] : memref<8x4x192xf32, #tpu.memory_space<vmem>>, vector<1x4x192xf32>
    %509 = vector.shape_cast %508 : vector<1x4x192xf32> to vector<4x192xf32>
    %510 = arith.index_cast %506 : i32 to index
    %c0_163 = arith.constant 0 : index
    %c0_164 = arith.constant 0 : index
    %511 = vector.load %arg0[%510, %c0_163, %c0_164] : memref<8x4x192xf32, #tpu.memory_space<vmem>>, vector<1x4x192xf32>
    %512 = vector.shape_cast %511 : vector<1x4x192xf32> to vector<4x192xf32>
    %cst_165 = arith.constant dense<0.000000e+00> : vector<4x96xf32>
    %513 = tpu.matmul %466, %0, %cst_165 {dimension_numbers = #tpu.dot_dimension_numbers<[1], [0], [0], [1], [0, 0, 1, 1], [], []>} : vector<4x32xf32>, vector<32x96xf32>, vector<4x96xf32> -> vector<4x96xf32>
    %514 = vector.broadcast %2 : vector<1x96xf32> to vector<4x96xf32>
    %515 = arith.addf %513, %514 : vector<4x96xf32>
    %cst_166 = arith.constant dense<0.000000e+00> : vector<4x96xf32>
    %516 = tpu.matmul %497, %1, %cst_166 {dimension_numbers = #tpu.dot_dimension_numbers<[1], [0], [0], [1], [0, 0, 1, 1], [], []>} : vector<4x32xf32>, vector<32x96xf32>, vector<4x96xf32> -> vector<4x96xf32>
    %517 = vector.broadcast %3 : vector<1x96xf32> to vector<4x96xf32>
    %518 = arith.addf %516, %517 : vector<4x96xf32>
    %519 = vector.extract_strided_slice %509 {offsets = [0, 0], sizes = [4, 96], strides = [1, 1]} : vector<4x192xf32> to vector<4x96xf32>
    %520 = vector.extract_strided_slice %519 {offsets = [0, 0], sizes = [4, 32], strides = [1, 1]} : vector<4x96xf32> to vector<4x32xf32>
    %521 = vector.extract_strided_slice %519 {offsets = [0, 32], sizes = [4, 32], strides = [1, 1]} : vector<4x96xf32> to vector<4x32xf32>
    %522 = vector.extract_strided_slice %519 {offsets = [0, 64], sizes = [4, 32], strides = [1, 1]} : vector<4x96xf32> to vector<4x32xf32>
    %523 = vector.extract_strided_slice %515 {offsets = [0, 0], sizes = [4, 32], strides = [1, 1]} : vector<4x96xf32> to vector<4x32xf32>
    %524 = vector.extract_strided_slice %515 {offsets = [0, 32], sizes = [4, 32], strides = [1, 1]} : vector<4x96xf32> to vector<4x32xf32>
    %525 = vector.extract_strided_slice %515 {offsets = [0, 64], sizes = [4, 32], strides = [1, 1]} : vector<4x96xf32> to vector<4x32xf32>
    %526 = arith.addf %520, %523 : vector<4x32xf32>
    %cst_167 = arith.constant 5.000000e-01 : f32
    %527 = vector.broadcast %cst_167 : f32 to vector<4x32xf32>
    %528 = arith.mulf %527, %526 : vector<4x32xf32>
    %529 = math.tanh %528 : vector<4x32xf32>
    %cst_168 = arith.constant 1.000000e+00 : f32
    %530 = vector.broadcast %cst_168 : f32 to vector<4x32xf32>
    %531 = arith.addf %529, %530 : vector<4x32xf32>
    %cst_169 = arith.constant 5.000000e-01 : f32
    %532 = vector.broadcast %cst_169 : f32 to vector<4x32xf32>
    %533 = arith.mulf %532, %531 : vector<4x32xf32>
    %534 = arith.addf %521, %524 : vector<4x32xf32>
    %cst_170 = arith.constant 5.000000e-01 : f32
    %535 = vector.broadcast %cst_170 : f32 to vector<4x32xf32>
    %536 = arith.mulf %535, %534 : vector<4x32xf32>
    %537 = math.tanh %536 : vector<4x32xf32>
    %cst_171 = arith.constant 1.000000e+00 : f32
    %538 = vector.broadcast %cst_171 : f32 to vector<4x32xf32>
    %539 = arith.addf %537, %538 : vector<4x32xf32>
    %cst_172 = arith.constant 5.000000e-01 : f32
    %540 = vector.broadcast %cst_172 : f32 to vector<4x32xf32>
    %541 = arith.mulf %540, %539 : vector<4x32xf32>
    %542 = arith.mulf %533, %525 : vector<4x32xf32>
    %543 = arith.addf %522, %542 : vector<4x32xf32>
    %544 = math.tanh %543 : vector<4x32xf32>
    %cst_173 = arith.constant 1.000000e+00 : f32
    %545 = vector.broadcast %cst_173 : f32 to vector<4x32xf32>
    %546 = arith.subf %545, %541 : vector<4x32xf32>
    %547 = arith.mulf %546, %544 : vector<4x32xf32>
    %548 = arith.mulf %541, %466 : vector<4x32xf32>
    %549 = arith.addf %547, %548 : vector<4x32xf32>
    %550 = vector.extract_strided_slice %512 {offsets = [0, 96], sizes = [4, 96], strides = [1, 1]} : vector<4x192xf32> to vector<4x96xf32>
    %551 = vector.extract_strided_slice %550 {offsets = [0, 0], sizes = [4, 32], strides = [1, 1]} : vector<4x96xf32> to vector<4x32xf32>
    %552 = vector.extract_strided_slice %550 {offsets = [0, 32], sizes = [4, 32], strides = [1, 1]} : vector<4x96xf32> to vector<4x32xf32>
    %553 = vector.extract_strided_slice %550 {offsets = [0, 64], sizes = [4, 32], strides = [1, 1]} : vector<4x96xf32> to vector<4x32xf32>
    %554 = vector.extract_strided_slice %518 {offsets = [0, 0], sizes = [4, 32], strides = [1, 1]} : vector<4x96xf32> to vector<4x32xf32>
    %555 = vector.extract_strided_slice %518 {offsets = [0, 32], sizes = [4, 32], strides = [1, 1]} : vector<4x96xf32> to vector<4x32xf32>
    %556 = vector.extract_strided_slice %518 {offsets = [0, 64], sizes = [4, 32], strides = [1, 1]} : vector<4x96xf32> to vector<4x32xf32>
    %557 = arith.addf %551, %554 : vector<4x32xf32>
    %cst_174 = arith.constant 5.000000e-01 : f32
    %558 = vector.broadcast %cst_174 : f32 to vector<4x32xf32>
    %559 = arith.mulf %558, %557 : vector<4x32xf32>
    %560 = math.tanh %559 : vector<4x32xf32>
    %cst_175 = arith.constant 1.000000e+00 : f32
    %561 = vector.broadcast %cst_175 : f32 to vector<4x32xf32>
    %562 = arith.addf %560, %561 : vector<4x32xf32>
    %cst_176 = arith.constant 5.000000e-01 : f32
    %563 = vector.broadcast %cst_176 : f32 to vector<4x32xf32>
    %564 = arith.mulf %563, %562 : vector<4x32xf32>
    %565 = arith.addf %552, %555 : vector<4x32xf32>
    %cst_177 = arith.constant 5.000000e-01 : f32
    %566 = vector.broadcast %cst_177 : f32 to vector<4x32xf32>
    %567 = arith.mulf %566, %565 : vector<4x32xf32>
    %568 = math.tanh %567 : vector<4x32xf32>
    %cst_178 = arith.constant 1.000000e+00 : f32
    %569 = vector.broadcast %cst_178 : f32 to vector<4x32xf32>
    %570 = arith.addf %568, %569 : vector<4x32xf32>
    %cst_179 = arith.constant 5.000000e-01 : f32
    %571 = vector.broadcast %cst_179 : f32 to vector<4x32xf32>
    %572 = arith.mulf %571, %570 : vector<4x32xf32>
    %573 = arith.mulf %564, %556 : vector<4x32xf32>
    %574 = arith.addf %553, %573 : vector<4x32xf32>
    %575 = math.tanh %574 : vector<4x32xf32>
    %cst_180 = arith.constant 1.000000e+00 : f32
    %576 = vector.broadcast %cst_180 : f32 to vector<4x32xf32>
    %577 = arith.subf %576, %572 : vector<4x32xf32>
    %578 = arith.mulf %577, %575 : vector<4x32xf32>
    %579 = arith.mulf %572, %497 : vector<4x32xf32>
    %580 = arith.addf %578, %579 : vector<4x32xf32>
    %581 = arith.index_cast %c6_i32 : i32 to index
    %c0_181 = arith.constant 0 : index
    %c0_182 = arith.constant 0 : index
    %582 = vector.load %arg6[%581, %c0_181, %c0_182] : memref<8x4x32xf32, #tpu.memory_space<vmem>>, vector<1x4x32xf32>
    %583 = vector.shape_cast %582 : vector<1x4x32xf32> to vector<4x32xf32>
    %584 = vector.shape_cast %549 : vector<4x32xf32> to vector<1x4x32xf32>
    tpu.vector_store %arg6[%581, %c0_181, %c0_182], %584 {strides = array<i32>} : memref<8x4x32xf32, #tpu.memory_space<vmem>>, vector<1x4x32xf32>,
    %585 = arith.index_cast %506 : i32 to index
    %c0_183 = arith.constant 0 : index
    %c0_184 = arith.constant 0 : index
    %586 = vector.load %arg7[%585, %c0_183, %c0_184] : memref<8x4x32xf32, #tpu.memory_space<vmem>>, vector<1x4x32xf32>
    %587 = vector.shape_cast %586 : vector<1x4x32xf32> to vector<4x32xf32>
    %588 = vector.shape_cast %580 : vector<4x32xf32> to vector<1x4x32xf32>
    tpu.vector_store %arg7[%585, %c0_183, %c0_184], %588 {strides = array<i32>} : memref<8x4x32xf32, #tpu.memory_space<vmem>>, vector<1x4x32xf32>,
    %c7_i32_185 = arith.constant 7 : i32
    %c7_i32_186 = arith.constant 7 : i32
    %589 = arith.subi %c7_i32_186, %c7_i32_185 : i32
    %590 = arith.index_cast %c7_i32_185 : i32 to index
    %c0_187 = arith.constant 0 : index
    %c0_188 = arith.constant 0 : index
    %591 = vector.load %arg0[%590, %c0_187, %c0_188] : memref<8x4x192xf32, #tpu.memory_space<vmem>>, vector<1x4x192xf32>
    %592 = vector.shape_cast %591 : vector<1x4x192xf32> to vector<4x192xf32>
    %593 = arith.index_cast %589 : i32 to index
    %c0_189 = arith.constant 0 : index
    %c0_190 = arith.constant 0 : index
    %594 = vector.load %arg0[%593, %c0_189, %c0_190] : memref<8x4x192xf32, #tpu.memory_space<vmem>>, vector<1x4x192xf32>
    %595 = vector.shape_cast %594 : vector<1x4x192xf32> to vector<4x192xf32>
    %cst_191 = arith.constant dense<0.000000e+00> : vector<4x96xf32>
    %596 = tpu.matmul %549, %0, %cst_191 {dimension_numbers = #tpu.dot_dimension_numbers<[1], [0], [0], [1], [0, 0, 1, 1], [], []>} : vector<4x32xf32>, vector<32x96xf32>, vector<4x96xf32> -> vector<4x96xf32>
    %597 = vector.broadcast %2 : vector<1x96xf32> to vector<4x96xf32>
    %598 = arith.addf %596, %597 : vector<4x96xf32>
    %cst_192 = arith.constant dense<0.000000e+00> : vector<4x96xf32>
    %599 = tpu.matmul %580, %1, %cst_192 {dimension_numbers = #tpu.dot_dimension_numbers<[1], [0], [0], [1], [0, 0, 1, 1], [], []>} : vector<4x32xf32>, vector<32x96xf32>, vector<4x96xf32> -> vector<4x96xf32>
    %600 = vector.broadcast %3 : vector<1x96xf32> to vector<4x96xf32>
    %601 = arith.addf %599, %600 : vector<4x96xf32>
    %602 = vector.extract_strided_slice %592 {offsets = [0, 0], sizes = [4, 96], strides = [1, 1]} : vector<4x192xf32> to vector<4x96xf32>
    %603 = vector.extract_strided_slice %602 {offsets = [0, 0], sizes = [4, 32], strides = [1, 1]} : vector<4x96xf32> to vector<4x32xf32>
    %604 = vector.extract_strided_slice %602 {offsets = [0, 32], sizes = [4, 32], strides = [1, 1]} : vector<4x96xf32> to vector<4x32xf32>
    %605 = vector.extract_strided_slice %602 {offsets = [0, 64], sizes = [4, 32], strides = [1, 1]} : vector<4x96xf32> to vector<4x32xf32>
    %606 = vector.extract_strided_slice %598 {offsets = [0, 0], sizes = [4, 32], strides = [1, 1]} : vector<4x96xf32> to vector<4x32xf32>
    %607 = vector.extract_strided_slice %598 {offsets = [0, 32], sizes = [4, 32], strides = [1, 1]} : vector<4x96xf32> to vector<4x32xf32>
    %608 = vector.extract_strided_slice %598 {offsets = [0, 64], sizes = [4, 32], strides = [1, 1]} : vector<4x96xf32> to vector<4x32xf32>
    %609 = arith.addf %603, %606 : vector<4x32xf32>
    %cst_193 = arith.constant 5.000000e-01 : f32
    %610 = vector.broadcast %cst_193 : f32 to vector<4x32xf32>
    %611 = arith.mulf %610, %609 : vector<4x32xf32>
    %612 = math.tanh %611 : vector<4x32xf32>
    %cst_194 = arith.constant 1.000000e+00 : f32
    %613 = vector.broadcast %cst_194 : f32 to vector<4x32xf32>
    %614 = arith.addf %612, %613 : vector<4x32xf32>
    %cst_195 = arith.constant 5.000000e-01 : f32
    %615 = vector.broadcast %cst_195 : f32 to vector<4x32xf32>
    %616 = arith.mulf %615, %614 : vector<4x32xf32>
    %617 = arith.addf %604, %607 : vector<4x32xf32>
    %cst_196 = arith.constant 5.000000e-01 : f32
    %618 = vector.broadcast %cst_196 : f32 to vector<4x32xf32>
    %619 = arith.mulf %618, %617 : vector<4x32xf32>
    %620 = math.tanh %619 : vector<4x32xf32>
    %cst_197 = arith.constant 1.000000e+00 : f32
    %621 = vector.broadcast %cst_197 : f32 to vector<4x32xf32>
    %622 = arith.addf %620, %621 : vector<4x32xf32>
    %cst_198 = arith.constant 5.000000e-01 : f32
    %623 = vector.broadcast %cst_198 : f32 to vector<4x32xf32>
    %624 = arith.mulf %623, %622 : vector<4x32xf32>
    %625 = arith.mulf %616, %608 : vector<4x32xf32>
    %626 = arith.addf %605, %625 : vector<4x32xf32>
    %627 = math.tanh %626 : vector<4x32xf32>
    %cst_199 = arith.constant 1.000000e+00 : f32
    %628 = vector.broadcast %cst_199 : f32 to vector<4x32xf32>
    %629 = arith.subf %628, %624 : vector<4x32xf32>
    %630 = arith.mulf %629, %627 : vector<4x32xf32>
    %631 = arith.mulf %624, %549 : vector<4x32xf32>
    %632 = arith.addf %630, %631 : vector<4x32xf32>
    %633 = vector.extract_strided_slice %595 {offsets = [0, 96], sizes = [4, 96], strides = [1, 1]} : vector<4x192xf32> to vector<4x96xf32>
    %634 = vector.extract_strided_slice %633 {offsets = [0, 0], sizes = [4, 32], strides = [1, 1]} : vector<4x96xf32> to vector<4x32xf32>
    %635 = vector.extract_strided_slice %633 {offsets = [0, 32], sizes = [4, 32], strides = [1, 1]} : vector<4x96xf32> to vector<4x32xf32>
    %636 = vector.extract_strided_slice %633 {offsets = [0, 64], sizes = [4, 32], strides = [1, 1]} : vector<4x96xf32> to vector<4x32xf32>
    %637 = vector.extract_strided_slice %601 {offsets = [0, 0], sizes = [4, 32], strides = [1, 1]} : vector<4x96xf32> to vector<4x32xf32>
    %638 = vector.extract_strided_slice %601 {offsets = [0, 32], sizes = [4, 32], strides = [1, 1]} : vector<4x96xf32> to vector<4x32xf32>
    %639 = vector.extract_strided_slice %601 {offsets = [0, 64], sizes = [4, 32], strides = [1, 1]} : vector<4x96xf32> to vector<4x32xf32>
    %640 = arith.addf %634, %637 : vector<4x32xf32>
    %cst_200 = arith.constant 5.000000e-01 : f32
    %641 = vector.broadcast %cst_200 : f32 to vector<4x32xf32>
    %642 = arith.mulf %641, %640 : vector<4x32xf32>
    %643 = math.tanh %642 : vector<4x32xf32>
    %cst_201 = arith.constant 1.000000e+00 : f32
    %644 = vector.broadcast %cst_201 : f32 to vector<4x32xf32>
    %645 = arith.addf %643, %644 : vector<4x32xf32>
    %cst_202 = arith.constant 5.000000e-01 : f32
    %646 = vector.broadcast %cst_202 : f32 to vector<4x32xf32>
    %647 = arith.mulf %646, %645 : vector<4x32xf32>
    %648 = arith.addf %635, %638 : vector<4x32xf32>
    %cst_203 = arith.constant 5.000000e-01 : f32
    %649 = vector.broadcast %cst_203 : f32 to vector<4x32xf32>
    %650 = arith.mulf %649, %648 : vector<4x32xf32>
    %651 = math.tanh %650 : vector<4x32xf32>
    %cst_204 = arith.constant 1.000000e+00 : f32
    %652 = vector.broadcast %cst_204 : f32 to vector<4x32xf32>
    %653 = arith.addf %651, %652 : vector<4x32xf32>
    %cst_205 = arith.constant 5.000000e-01 : f32
    %654 = vector.broadcast %cst_205 : f32 to vector<4x32xf32>
    %655 = arith.mulf %654, %653 : vector<4x32xf32>
    %656 = arith.mulf %647, %639 : vector<4x32xf32>
    %657 = arith.addf %636, %656 : vector<4x32xf32>
    %658 = math.tanh %657 : vector<4x32xf32>
    %cst_206 = arith.constant 1.000000e+00 : f32
    %659 = vector.broadcast %cst_206 : f32 to vector<4x32xf32>
    %660 = arith.subf %659, %655 : vector<4x32xf32>
    %661 = arith.mulf %660, %658 : vector<4x32xf32>
    %662 = arith.mulf %655, %580 : vector<4x32xf32>
    %663 = arith.addf %661, %662 : vector<4x32xf32>
    %664 = arith.index_cast %c7_i32_185 : i32 to index
    %c0_207 = arith.constant 0 : index
    %c0_208 = arith.constant 0 : index
    %665 = vector.load %arg6[%664, %c0_207, %c0_208] : memref<8x4x32xf32, #tpu.memory_space<vmem>>, vector<1x4x32xf32>
    %666 = vector.shape_cast %665 : vector<1x4x32xf32> to vector<4x32xf32>
    %667 = vector.shape_cast %632 : vector<4x32xf32> to vector<1x4x32xf32>
    tpu.vector_store %arg6[%664, %c0_207, %c0_208], %667 {strides = array<i32>} : memref<8x4x32xf32, #tpu.memory_space<vmem>>, vector<1x4x32xf32>,
    %668 = arith.index_cast %589 : i32 to index
    %c0_209 = arith.constant 0 : index
    %c0_210 = arith.constant 0 : index
    %669 = vector.load %arg7[%668, %c0_209, %c0_210] : memref<8x4x32xf32, #tpu.memory_space<vmem>>, vector<1x4x32xf32>
    %670 = vector.shape_cast %669 : vector<1x4x32xf32> to vector<4x32xf32>
    %671 = vector.shape_cast %663 : vector<4x32xf32> to vector<1x4x32xf32>
    tpu.vector_store %arg7[%668, %c0_209, %c0_210], %671 {strides = array<i32>} : memref<8x4x32xf32, #tpu.memory_space<vmem>>, vector<1x4x32xf32>,
    %c8_i32 = arith.constant 8 : i32
    return
  }
}

</mosaic_0001>

<llo_original>
// kernel: gru_block_forward.2
$region0: #{gru_block_forward.2}
  #allocation0 [shape = 'u32[]', space=smem, size = 0x4, offset = 0x4, fixed_abs, tag = 'smem constant byte address 0x4 - core index']
  #allocation1 [shape = 'u32[72,128]{1,0:T(1,128)}', space=vmem, size = 0x9000, scoped, tag = 'internal scratch']
  %s0 = inlined_call_operand.vmem [shape: f32[8,4,192], index: 0, kind: input, shape index: {}]
  %s1 = inlined_call_operand.vmem [shape: f32[2,4,32], index: 1, kind: input, shape index: {}]
  %s2 = inlined_call_operand.vmem [shape: f32[32,96], index: 2, kind: input, shape index: {}]
  %s3 = inlined_call_operand.vmem [shape: f32[32,96], index: 3, kind: input, shape index: {}]
  %s4 = inlined_call_operand.vmem [shape: f32[1,96], index: 4, kind: input, shape index: {}]
  %s5 = inlined_call_operand.vmem [shape: f32[1,96], index: 5, kind: input, shape index: {}]
  %s6 = inlined_call_operand.vmem [shape: f32[8,4,32], index: 6, kind: output, shape index: {0}]
  %s7 = inlined_call_operand.vmem [shape: f32[8,4,32], index: 7, kind: output, shape index: {1}]
  %8 = xla_tuple %s6, %s7
  %s9 = sld [smem:[#allocation0]]
  $region42: #{gru_block_forward.2} parent=0
    _
  %s11 = ssub.s32 1, %s9
  %s12 = scalar_select 0, %s11, %s9
  // Predicated region
  $region2: #{gru_block_forward.2} parent=0 // pred_check
    _
  $region3: #{gru_block_forward.2} parent=0 // pred_check_branch
    %14 = sbr.rel (0) target = $region5
  $region4: #{gru_block_forward.2} parent=0 // pred_region
    _
  $region5: #{gru_block_forward.2} parent=0 // pred_fallthru
    _
  // Predicated region
  $region6: #{gru_block_forward.2} parent=0 // pred_check
    _
  $region7: #{gru_block_forward.2} parent=0 // pred_check_branch
    %16 = sbr.rel (0) target = $region9
  $region8: #{gru_block_forward.2} parent=0 // pred_region
    _
  $region9: #{gru_block_forward.2} parent=0 // pred_fallthru
    _
  // Predicated region
  $region10: #{gru_block_forward.2} parent=0 // pred_check
    _
  $region11: #{gru_block_forward.2} parent=0 // pred_check_branch
    %18 = sbr.rel (0) target = $region13
  $region12: #{gru_block_forward.2} parent=0 // pred_region
    _
  $region13: #{gru_block_forward.2} parent=0 // pred_fallthru
    _
  // Predicated region
  $region14: #{gru_block_forward.2} parent=0 // pred_check
    _
  $region15: #{gru_block_forward.2} parent=0 // pred_check_branch
    %20 = sbr.rel (0) target = $region17
  $region16: #{gru_block_forward.2} parent=0 // pred_region
    _
  $region17: #{gru_block_forward.2} parent=0 // pred_fallthru
    _
  // Predicated region
  $region18: #{gru_block_forward.2} parent=0 // pred_check
    _
  $region19: #{gru_block_forward.2} parent=0 // pred_check_branch
    %22 = sbr.rel (0) target = $region21
  $region20: #{gru_block_forward.2} parent=0 // pred_region
    _
  $region21: #{gru_block_forward.2} parent=0 // pred_fallthru
    _
  // Predicated region
  $region22: #{gru_block_forward.2} parent=0 // pred_check
    _
  $region23: #{gru_block_forward.2} parent=0 // pred_check_branch
    %24 = sbr.rel (0) target = $region25
  $region24: #{gru_block_forward.2} parent=0 // pred_region
    _
  $region25: #{gru_block_forward.2} parent=0 // pred_fallthru
    _
  %v25 = vld [vmem:[%s2] sm:$0xff]
  %v26 = vld [vmem:[%s2 + $0x8] sm:$0xff]
  %v27 = vld [vmem:[%s2 + $0x10] sm:$0xff]
  %v28 = vld [vmem:[%s2 + $0x18] sm:$0xff]
  %v29 = vld [vmem:[%s3] sm:$0xff]
  %v30 = vld [vmem:[%s3 + $0x8] sm:$0xff]
  %v31 = vld [vmem:[%s3 + $0x10] sm:$0xff]
  %v32 = vld [vmem:[%s3 + $0x18] sm:$0xff]
  %v33 = vld [vmem:[%s4] sm:$0x1]
  %v34 = vld [vmem:[%s5] sm:$0x1]
  %v35 = vld [vmem:[%s1] sm:$0xf]
  %s36 = scalar_lea.vmem %s1, 4
  %v37 = vld [vmem:[%s36] sm:$0xf]
  %v38 = vld [vmem:[%s0] sm:$0xff]
  %s39 = scalar_lea.vmem %s0, 56
  %v40 = vld [vmem:[%s39] sm:$0xff]
  %v42 = vperm.slane %v33, 0
  %vm44 = vcmask 261120
  %v46 = vsel %vm44, %v35, 0
  %48 = vmatpush.msra.mxu0 0.0
  %49 = vmatpush.msra.mxu0 0.0
  %50 = vmatpush.msra.mxu0 0.0
  %51 = vmatpush.msra.mxu0 0.0
  %52 = vmatpush.msra.mxu0 0.0
  %53 = vmatpush.msra.mxu0 0.0
  %54 = vmatpush.msra.mxu0 0.0
  %55 = vmatpush.msra.mxu0 0.0
  %56 = vmatpush.msra.mxu0 0.0
  %57 = vmatpush.msra.mxu0 0.0
  %58 = vmatpush.msra.mxu0 0.0
  %59 = vmatpush.msra.mxu0 0.0
  %60 = vmatpush.msra.mxu0 %v28
  %61 = vmatpush.msra.mxu0 %v27
  %62 = vmatpush.msra.mxu0 %v26
  %63 = vmatpush.msra.mxu0 %v25
  %64 = vmatmul.f32.gmra.mxu0 %v46
  %v65 = vpop.f32.mrf.mxu0
  %v66 = vadd.f32 %v42, %v65
  %67 = vdwg.mxu0
  %v69 = vperm.slane %v34, 0
  %v72 = vsel %vm44, %v37, 0
  %74 = vmatpush.msra.mxu0 0.0
  %75 = vmatpush.msra.mxu0 0.0
  %76 = vmatpush.msra.mxu0 0.0
  %77 = vmatpush.msra.mxu0 0.0
  %78 = vmatpush.msra.mxu0 0.0
  %79 = vmatpush.msra.mxu0 0.0
  %80 = vmatpush.msra.mxu0 0.0
  %81 = vmatpush.msra.mxu0 0.0
  %82 = vmatpush.msra.mxu0 0.0
  %83 = vmatpush.msra.mxu0 0.0
  %84 = vmatpush.msra.mxu0 0.0
  %85 = vmatpush.msra.mxu0 0.0
  %86 = vmatpush.msra.mxu0 %v32
  %87 = vmatpush.msra.mxu0 %v31
  %88 = vmatpush.msra.mxu0 %v30
  %89 = vmatpush.msra.mxu0 %v29
  %90 = vmatmul.f32.gmra.mxu0 %v72
  %v91 = vpop.f32.mrf.mxu0
  %v92 = vadd.f32 %v69, %v91
  %93 = vdwg.mxu0
  %v94 = vadd.f32 %v38, %v66
  %v95 = vmul.f32 %v94, 0.5
  %v96 = vtanh.pop %v95
  %v97 = vadd.f32 %v96, 1.0
  %v98 = vmul.f32 %v97, 0.5
  %100 = vrot.lane.b32.xlu0 %v66, 64
  %v101 = vpop.permute.xlu0 %100
  %v103 = vmul.f32 %v98, %v101
  %105 = vrot.lane.b32.xlu0 %v103, 64
  %v106 = vpop.permute.xlu0 %105
  %v108 = vadd.f32 %v38, %v106
  %v109 = vtanh.pop %v108
  %v110 = vsub.f32 1.0, %v98
  %112 = vrot.lane.b32.xlu0 %v109, 96
  %v113 = vpop.permute.xlu0 %112
  %v115 = vmul.f32 %v110, %v113
  %116 = vrot.lane.b32.xlu0 %v35, 32
  %v117 = vpop.permute.xlu0 %116
  %v119 = vmul.f32 %v98, %v117
  %v120 = vadd.f32 %v115, %v119
  %122 = vrot.lane.b32.xlu0 %v92, 96
  %v123 = vpop.permute.xlu0 %122
  %v125 = vadd.f32 %v40, %v123
  %v126 = vmul.f32 %v125, 0.5
  %v127 = vtanh.pop %v126
  %v128 = vadd.f32 %v127, 1.0
  %v129 = vmul.f32 %v128, 0.5
  %v131 = vrot.slane %v40, 4
  %v133 = vadd.f32 %v131, %v123
  %v134 = vmul.f32 %v133, 0.5
  %v135 = vtanh.pop %v134
  %v136 = vadd.f32 %v135, 1.0
  %v137 = vmul.f32 %v136, 0.5
  %138 = vrot.lane.b32.xlu0 %v92, 32
  %v139 = vpop.permute.xlu0 %138
  %v141 = vmul.f32 %v129, %v139
  %142 = vrot.lane.b32.xlu0 %v40, 96
  %v143 = vpop.permute.xlu0 %142
  %v144 = vrot.slane %v143, 4
  %147 = vrot.lane.b32.xlu0 %v141, 32
  %v148 = vpop.permute.xlu0 %147
  %v150 = vadd.f32 %v144, %v148
  %v151 = vtanh.pop %v150
  %v152 = vsub.f32 1.0, %v137
  %v153 = vmul.f32 %v152, %v151
  %v154 = vmul.f32 %v137, %v37
  %v155 = vadd.f32 %v153, %v154
  %157 = vst [vmem:[#allocation1] ss:$2 sm:$0xff] %v120
  %v158 = vld.sshfl [vmem:[#allocation1] sm:$0xff pattern:$0x75316420]
  %159 = vrot.lane.b32.xlu0 %v158, 96
  %v160 = vpop.permute.xlu0 %159
  %vm162 = vcmask 257024
  %163 = vst.msk [vmem:[%s6] sm:$0xf] %vm162, %v160
  %s164 = scalar_lea.vmem %s7, 28
  %165 = vst.msk [vmem:[%s164] sm:$0xf] %vm162, %v155
  %s166 = scalar_lea.vmem %s0, 8
  %v167 = vld [vmem:[%s166] sm:$0xff]
  %s168 = scalar_lea.vmem %s0, 48
  %v169 = vld [vmem:[%s168] sm:$0xff]
  %170 = vst [vmem:[#allocation1] ss:$2 sm:$0xff] %v120
  %v171 = vld.sshfl [vmem:[#allocation1] sm:$0xff pattern:$0x75316420]
  %172 = vrot.lane.b32.xlu0 %v171, 96
  %v173 = vpop.permute.xlu0 %172
  %v174 = vsel %vm44, %v173, 0
  %176 = vmatpush.msra.mxu0 0.0
  %177 = vmatpush.msra.mxu0 0.0
  %178 = vmatpush.msra.mxu0 0.0
  %179 = vmatpush.msra.mxu0 0.0
  %180 = vmatpush.msra.mxu0 0.0
  %181 = vmatpush.msra.mxu0 0.0
  %182 = vmatpush.msra.mxu0 0.0
  %183 = vmatpush.msra.mxu0 0.0
  %184 = vmatpush.msra.mxu0 0.0
  %185 = vmatpush.msra.mxu0 0.0
  %186 = vmatpush.msra.mxu0 0.0
  %187 = vmatpush.msra.mxu0 0.0
  %188 = vmatpush.msra.mxu0 %v28
  %189 = vmatpush.msra.mxu0 %v27
  %190 = vmatpush.msra.mxu0 %v26
  %191 = vmatpush.msra.mxu0 %v25
  %192 = vmatmul.f32.gmra.mxu0 %v174
  %v193 = vpop.f32.mrf.mxu0
  %v194 = vadd.f32 %v42, %v193
  %195 = vdwg.mxu0
  %v197 = vsel %vm44, %v155, 0
  %199 = vmatpush.msra.mxu0 0.0
  %200 = vmatpush.msra.mxu0 0.0
  %201 = vmatpush.msra.mxu0 0.0
  %202 = vmatpush.msra.mxu0 0.0
  %203 = vmatpush.msra.mxu0 0.0
  %204 = vmatpush.msra.mxu0 0.0
  %205 = vmatpush.msra.mxu0 0.0
  %206 = vmatpush.msra.mxu0 0.0
  %207 = vmatpush.msra.mxu0 0.0
  %208 = vmatpush.msra.mxu0 0.0
  %209 = vmatpush.msra.mxu0 0.0
  %210 = vmatpush.msra.mxu0 0.0
  %211 = vmatpush.msra.mxu0 %v32
  %212 = vmatpush.msra.mxu0 %v31
  %213 = vmatpush.msra.mxu0 %v30
  %214 = vmatpush.msra.mxu0 %v29
  %215 = vmatmul.f32.gmra.mxu0 %v197
  %v216 = vpop.f32.mrf.mxu0
  %v217 = vadd.f32 %v69, %v216
  %218 = vdwg.mxu0
  %v219 = vadd.f32 %v167, %v194
  %v220 = vmul.f32 %v219, 0.5
  %v221 = vtanh.pop %v220
  %v222 = vadd.f32 %v221, 1.0
  %v223 = vmul.f32 %v222, 0.5
  %225 = vrot.lane.b32.xlu0 %v194, 64
  %v226 = vpop.permute.xlu0 %225
  %v228 = vmul.f32 %v223, %v226
  %230 = vrot.lane.b32.xlu0 %v228, 64
  %v231 = vpop.permute.xlu0 %230
  %v233 = vadd.f32 %v167, %v231
  %v234 = vtanh.pop %v233
  %v235 = vsub.f32 1.0, %v223
  %237 = vrot.lane.b32.xlu0 %v234, 96
  %v238 = vpop.permute.xlu0 %237
  %v240 = vmul.f32 %v235, %v238
  %v241 = vmul.f32 %v223, %v120
  %v242 = vadd.f32 %v240, %v241
  %244 = vrot.lane.b32.xlu0 %v217, 96
  %v245 = vpop.permute.xlu0 %244
  %v247 = vadd.f32 %v169, %v245
  %v248 = vmul.f32 %v247, 0.5
  %v249 = vtanh.pop %v248
  %v250 = vadd.f32 %v249, 1.0
  %v251 = vmul.f32 %v250, 0.5
  %v253 = vrot.slane %v169, 4
  %v255 = vadd.f32 %v253, %v245
  %v256 = vmul.f32 %v255, 0.5
  %v257 = vtanh.pop %v256
  %v258 = vadd.f32 %v257, 1.0
  %v259 = vmul.f32 %v258, 0.5
  %260 = vrot.lane.b32.xlu0 %v217, 32
  %v261 = vpop.permute.xlu0 %260
  %v263 = vmul.f32 %v251, %v261
  %264 = vrot.lane.b32.xlu0 %v169, 96
  %v265 = vpop.permute.xlu0 %264
  %v266 = vrot.slane %v265, 4
  %269 = vrot.lane.b32.xlu0 %v263, 32
  %v270 = vpop.permute.xlu0 %269
  %v272 = vadd.f32 %v266, %v270
  %v273 = vtanh.pop %v272
  %v274 = vsub.f32 1.0, %v259
  %v275 = vmul.f32 %v274, %v273
  %v276 = vmul.f32 %v259, %v155
  %v277 = vadd.f32 %v275, %v276
  %279 = vst [vmem:[#allocation1] ss:$2 sm:$0xff] %v242
  %v280 = vld.sshfl [vmem:[#allocation1] sm:$0xff pattern:$0x75316420]
  %281 = vrot.lane.b32.xlu0 %v280, 96
  %v282 = vpop.permute.xlu0 %281
  %s284 = scalar_lea.vmem %s6, 4
  %285 = vst.msk [vmem:[%s284] sm:$0xf] %vm162, %v282
  %s286 = scalar_lea.vmem %s7, 24
  %287 = vst.msk [vmem:[%s286] sm:$0xf] %vm162, %v277
  %s288 = scalar_lea.vmem %s0, 16
  %v289 = vld [vmem:[%s288] sm:$0xff]
  %s290 = scalar_lea.vmem %s0, 40
  %v291 = vld [vmem:[%s290] sm:$0xff]
  %292 = vst [vmem:[#allocation1] ss:$2 sm:$0xff] %v242
  %v293 = vld.sshfl [vmem:[#allocation1] sm:$0xff pattern:$0x75316420]
  %294 = vrot.lane.b32.xlu0 %v293, 96
  %v295 = vpop.permute.xlu0 %294
  %v296 = vsel %vm44, %v295, 0
  %298 = vmatpush.msra.mxu0 0.0
  %299 = vmatpush.msra.mxu0 0.0
  %300 = vmatpush.msra.mxu0 0.0
  %301 = vmatpush.msra.mxu0 0.0
  %302 = vmatpush.msra.mxu0 0.0
  %303 = vmatpush.msra.mxu0 0.0
  %304 = vmatpush.msra.mxu0 0.0
  %305 = vmatpush.msra.mxu0 0.0
  %306 = vmatpush.msra.mxu0 0.0
  %307 = vmatpush.msra.mxu0 0.0
  %308 = vmatpush.msra.mxu0 0.0
  %309 = vmatpush.msra.mxu0 0.0
  %310 = vmatpush.msra.mxu0 %v28
  %311 = vmatpush.msra.mxu0 %v27
  %312 = vmatpush.msra.mxu0 %v26
  %313 = vmatpush.msra.mxu0 %v25
  %314 = vmatmul.f32.gmra.mxu0 %v296
  %v315 = vpop.f32.mrf.mxu0
  %v316 = vadd.f32 %v42, %v315
  %317 = vdwg.mxu0
  %v319 = vsel %vm44, %v277, 0
  %321 = vmatpush.msra.mxu0 0.0
  %322 = vmatpush.msra.mxu0 0.0
  %323 = vmatpush.msra.mxu0 0.0
  %324 = vmatpush.msra.mxu0 0.0
  %325 = vmatpush.msra.mxu0 0.0
  %326 = vmatpush.msra.mxu0 0.0
  %327 = vmatpush.msra.mxu0 0.0
  %328 = vmatpush.msra.mxu0 0.0
  %329 = vmatpush.msra.mxu0 0.0
  %330 = vmatpush.msra.mxu0 0.0
  %331 = vmatpush.msra.mxu0 0.0
  %332 = vmatpush.msra.mxu0 0.0
  %333 = vmatpush.msra.mxu0 %v32
  %334 = vmatpush.msra.mxu0 %v31
  %335 = vmatpush.msra.mxu0 %v30
  %336 = vmatpush.msra.mxu0 %v29
  %337 = vmatmul.f32.gmra.mxu0 %v319
  %v338 = vpop.f32.mrf.mxu0
  %v339 = vadd.f32 %v69, %v338
  %340 = vdwg.mxu0
  %v341 = vadd.f32 %v289, %v316
  %v342 = vmul.f32 %v341, 0.5
  %v343 = vtanh.pop %v342
  %v344 = vadd.f32 %v343, 1.0
  %v345 = vmul.f32 %v344, 0.5
  %347 = vrot.lane.b32.xlu0 %v316, 64
  %v348 = vpop.permute.xlu0 %347
  %v350 = vmul.f32 %v345, %v348
  %352 = vrot.lane.b32.xlu0 %v350, 64
  %v353 = vpop.permute.xlu0 %352
  %v355 = vadd.f32 %v289, %v353
  %v356 = vtanh.pop %v355
  %v357 = vsub.f32 1.0, %v345
  %359 = vrot.lane.b32.xlu0 %v356, 96
  %v360 = vpop.permute.xlu0 %359
  %v362 = vmul.f32 %v357, %v360
  %v363 = vmul.f32 %v345, %v242
  %v364 = vadd.f32 %v362, %v363
  %366 = vrot.lane.b32.xlu0 %v339, 96
  %v367 = vpop.permute.xlu0 %366
  %v369 = vadd.f32 %v291, %v367
  %v370 = vmul.f32 %v369, 0.5
  %v371 = vtanh.pop %v370
  %v372 = vadd.f32 %v371, 1.0
  %v373 = vmul.f32 %v372, 0.5
  %v375 = vrot.slane %v291, 4
  %v377 = vadd.f32 %v375, %v367
  %v378 = vmul.f32 %v377, 0.5
  %v379 = vtanh.pop %v378
  %v380 = vadd.f32 %v379, 1.0
  %v381 = vmul.f32 %v380, 0.5
  %382 = vrot.lane.b32.xlu0 %v339, 32
  %v383 = vpop.permute.xlu0 %382
  %v385 = vmul.f32 %v373, %v383
  %386 = vrot.lane.b32.xlu0 %v291, 96
  %v387 = vpop.permute.xlu0 %386
  %v388 = vrot.slane %v387, 4
  %391 = vrot.lane.b32.xlu0 %v385, 32
  %v392 = vpop.permute.xlu0 %391
  %v394 = vadd.f32 %v388, %v392
  %v395 = vtanh.pop %v394
  %v396 = vsub.f32 1.0, %v381
  %v397 = vmul.f32 %v396, %v395
  %v398 = vmul.f32 %v381, %v277
  %v399 = vadd.f32 %v397, %v398
  %401 = vst [vmem:[#allocation1] ss:$2 sm:$0xff] %v364
  %v402 = vld.sshfl [vmem:[#allocation1] sm:$0xff pattern:$0x75316420]
  %403 = vrot.lane.b32.xlu0 %v402, 96
  %v404 = vpop.permute.xlu0 %403
  %s406 = scalar_lea.vmem %s6, 8
  %407 = vst.msk [vmem:[%s406] sm:$0xf] %vm162, %v404
  %s408 = scalar_lea.vmem %s7, 20
  %409 = vst.msk [vmem:[%s408] sm:$0xf] %vm162, %v399
  %s410 = scalar_lea.vmem %s0, 24
  %v411 = vld [vmem:[%s410] sm:$0xff]
  %s412 = scalar_lea.vmem %s0, 32
  %v413 = vld [vmem:[%s412] sm:$0xff]
  %414 = vst [vmem:[#allocation1] ss:$2 sm:$0xff] %v364
  %v415 = vld.sshfl [vmem:[#allocation1] sm:$0xff pattern:$0x75316420]
  %416 = vrot.lane.b32.xlu0 %v415, 96
  %v417 = vpop.permute.xlu0 %416
  %v418 = vsel %vm44, %v417, 0
  %420 = vmatpush.msra.mxu0 0.0
  %421 = vmatpush.msra.mxu0 0.0
  %422 = vmatpush.msra.mxu0 0.0
  %423 = vmatpush.msra.mxu0 0.0
  %424 = vmatpush.msra.mxu0 0.0
  %425 = vmatpush.msra.mxu0 0.0
  %426 = vmatpush.msra.mxu0 0.0
  %427 = vmatpush.msra.mxu0 0.0
  %428 = vmatpush.msra.mxu0 0.0
  %429 = vmatpush.msra.mxu0 0.0
  %430 = vmatpush.msra.mxu0 0.0
  %431 = vmatpush.msra.mxu0 0.0
  %432 = vmatpush.msra.mxu0 %v28
  %433 = vmatpush.msra.mxu0 %v27
  %434 = vmatpush.msra.mxu0 %v26
  %435 = vmatpush.msra.mxu0 %v25
  %436 = vmatmul.f32.gmra.mxu0 %v418
  %v437 = vpop.f32.mrf.mxu0
  %v438 = vadd.f32 %v42, %v437
  %439 = vdwg.mxu0
  %v441 = vsel %vm44, %v399, 0
  %443 = vmatpush.msra.mxu0 0.0
  %444 = vmatpush.msra.mxu0 0.0
  %445 = vmatpush.msra.mxu0 0.0
  %446 = vmatpush.msra.mxu0 0.0
  %447 = vmatpush.msra.mxu0 0.0
  %448 = vmatpush.msra.mxu0 0.0
  %449 = vmatpush.msra.mxu0 0.0
  %450 = vmatpush.msra.mxu0 0.0
  %451 = vmatpush.msra.mxu0 0.0
  %452 = vmatpush.msra.mxu0 0.0
  %453 = vmatpush.msra.mxu0 0.0
  %454 = vmatpush.msra.mxu0 0.0
  %455 = vmatpush.msra.mxu0 %v32
  %456 = vmatpush.msra.mxu0 %v31
  %457 = vmatpush.msra.mxu0 %v30
  %458 = vmatpush.msra.mxu0 %v29
  %459 = vmatmul.f32.gmra.mxu0 %v441
  %v460 = vpop.f32.mrf.mxu0
  %v461 = vadd.f32 %v69, %v460
  %462 = vdwg.mxu0
  %v463 = vadd.f32 %v411, %v438
  %v464 = vmul.f32 %v463, 0.5
  %v465 = vtanh.pop %v464
  %v466 = vadd.f32 %v465, 1.0
  %v467 = vmul.f32 %v466, 0.5
  %469 = vrot.lane.b32.xlu0 %v438, 64
  %v470 = vpop.permute.xlu0 %469
  %v472 = vmul.f32 %v467, %v470
  %474 = vrot.lane.b32.xlu0 %v472, 64
  %v475 = vpop.permute.xlu0 %474
  %v477 = vadd.f32 %v411, %v475
  %v478 = vtanh.pop %v477
  %v479 = vsub.f32 1.0, %v467
  %481 = vrot.lane.b32.xlu0 %v478, 96
  %v482 = vpop.permute.xlu0 %481
  %v484 = vmul.f32 %v479, %v482
  %v485 = vmul.f32 %v467, %v364
  %v486 = vadd.f32 %v484, %v485
  %488 = vrot.lane.b32.xlu0 %v461, 96
  %v489 = vpop.permute.xlu0 %488
  %v491 = vadd.f32 %v413, %v489
  %v492 = vmul.f32 %v491, 0.5
  %v493 = vtanh.pop %v492
  %v494 = vadd.f32 %v493, 1.0
  %v495 = vmul.f32 %v494, 0.5
  %v497 = vrot.slane %v413, 4
  %v499 = vadd.f32 %v497, %v489
  %v500 = vmul.f32 %v499, 0.5
  %v501 = vtanh.pop %v500
  %v502 = vadd.f32 %v501, 1.0
  %v503 = vmul.f32 %v502, 0.5
  %504 = vrot.lane.b32.xlu0 %v461, 32
  %v505 = vpop.permute.xlu0 %504
  %v507 = vmul.f32 %v495, %v505
  %508 = vrot.lane.b32.xlu0 %v413, 96
  %v509 = vpop.permute.xlu0 %508
  %v510 = vrot.slane %v509, 4
  %513 = vrot.lane.b32.xlu0 %v507, 32
  %v514 = vpop.permute.xlu0 %513
  %v516 = vadd.f32 %v510, %v514
  %v517 = vtanh.pop %v516
  %v518 = vsub.f32 1.0, %v503
  %v519 = vmul.f32 %v518, %v517
  %v520 = vmul.f32 %v503, %v399
  %v521 = vadd.f32 %v519, %v520
  %523 = vst [vmem:[#allocation1] ss:$2 sm:$0xff] %v486
  %v524 = vld.sshfl [vmem:[#allocation1] sm:$0xff pattern:$0x75316420]
  %525 = vrot.lane.b32.xlu0 %v524, 96
  %v526 = vpop.permute.xlu0 %525
  %s528 = scalar_lea.vmem %s6, 12
  %529 = vst.msk [vmem:[%s528] sm:$0xf] %vm162, %v526
  %s530 = scalar_lea.vmem %s7, 16
  %531 = vst.msk [vmem:[%s530] sm:$0xf] %vm162, %v521
  %v532 = vld [vmem:[%s412] sm:$0xff]
  %v533 = vld [vmem:[%s410] sm:$0xff]
  %534 = vst [vmem:[#allocation1] ss:$2 sm:$0xff] %v486
  %v535 = vld.sshfl [vmem:[#allocation1] sm:$0xff pattern:$0x75316420]
  %536 = vrot.lane.b32.xlu0 %v535, 96
  %v537 = vpop.permute.xlu0 %536
  %v538 = vsel %vm44, %v537, 0
  %540 = vmatpush.msra.mxu0 0.0
  %541 = vmatpush.msra.mxu0 0.0
  %542 = vmatpush.msra.mxu0 0.0
  %543 = vmatpush.msra.mxu0 0.0
  %544 = vmatpush.msra.mxu0 0.0
  %545 = vmatpush.msra.mxu0 0.0
  %546 = vmatpush.msra.mxu0 0.0
  %547 = vmatpush.msra.mxu0 0.0
  %548 = vmatpush.msra.mxu0 0.0
  %549 = vmatpush.msra.mxu0 0.0
  %550 = vmatpush.msra.mxu0 0.0
  %551 = vmatpush.msra.mxu0 0.0
  %552 = vmatpush.msra.mxu0 %v28
  %553 = vmatpush.msra.mxu0 %v27
  %554 = vmatpush.msra.mxu0 %v26
  %555 = vmatpush.msra.mxu0 %v25
  %556 = vmatmul.f32.gmra.mxu0 %v538
  %v557 = vpop.f32.mrf.mxu0
  %v558 = vadd.f32 %v42, %v557
  %559 = vdwg.mxu0
  %v561 = vsel %vm44, %v521, 0
  %563 = vmatpush.msra.mxu0 0.0
  %564 = vmatpush.msra.mxu0 0.0
  %565 = vmatpush.msra.mxu0 0.0
  %566 = vmatpush.msra.mxu0 0.0
  %567 = vmatpush.msra.mxu0 0.0
  %568 = vmatpush.msra.mxu0 0.0
  %569 = vmatpush.msra.mxu0 0.0
  %570 = vmatpush.msra.mxu0 0.0
  %571 = vmatpush.msra.mxu0 0.0
  %572 = vmatpush.msra.mxu0 0.0
  %573 = vmatpush.msra.mxu0 0.0
  %574 = vmatpush.msra.mxu0 0.0
  %575 = vmatpush.msra.mxu0 %v32
  %576 = vmatpush.msra.mxu0 %v31
  %577 = vmatpush.msra.mxu0 %v30
  %578 = vmatpush.msra.mxu0 %v29
  %579 = vmatmul.f32.gmra.mxu0 %v561
  %v580 = vpop.f32.mrf.mxu0
  %v581 = vadd.f32 %v69, %v580
  %582 = vdwg.mxu0
  %v583 = vadd.f32 %v532, %v558
  %v584 = vmul.f32 %v583, 0.5
  %v585 = vtanh.pop %v584
  %v586 = vadd.f32 %v585, 1.0
  %v587 = vmul.f32 %v586, 0.5
  %589 = vrot.lane.b32.xlu0 %v558, 64
  %v590 = vpop.permute.xlu0 %589
  %v592 = vmul.f32 %v587, %v590
  %594 = vrot.lane.b32.xlu0 %v592, 64
  %v595 = vpop.permute.xlu0 %594
  %v597 = vadd.f32 %v532, %v595
  %v598 = vtanh.pop %v597
  %v599 = vsub.f32 1.0, %v587
  %601 = vrot.lane.b32.xlu0 %v598, 96
  %v602 = vpop.permute.xlu0 %601
  %v604 = vmul.f32 %v599, %v602
  %v605 = vmul.f32 %v587, %v486
  %v606 = vadd.f32 %v604, %v605
  %608 = vrot.lane.b32.xlu0 %v581, 96
  %v609 = vpop.permute.xlu0 %608
  %v611 = vadd.f32 %v533, %v609
  %v612 = vmul.f32 %v611, 0.5
  %v613 = vtanh.pop %v612
  %v614 = vadd.f32 %v613, 1.0
  %v615 = vmul.f32 %v614, 0.5
  %v617 = vrot.slane %v533, 4
  %v619 = vadd.f32 %v617, %v609
  %v620 = vmul.f32 %v619, 0.5
  %v621 = vtanh.pop %v620
  %v622 = vadd.f32 %v621, 1.0
  %v623 = vmul.f32 %v622, 0.5
  %624 = vrot.lane.b32.xlu0 %v581, 32
  %v625 = vpop.permute.xlu0 %624
  %v627 = vmul.f32 %v615, %v625
  %628 = vrot.lane.b32.xlu0 %v533, 96
  %v629 = vpop.permute.xlu0 %628
  %v630 = vrot.slane %v629, 4
  %633 = vrot.lane.b32.xlu0 %v627, 32
  %v634 = vpop.permute.xlu0 %633
  %v636 = vadd.f32 %v630, %v634
  %v637 = vtanh.pop %v636
  %v638 = vsub.f32 1.0, %v623
  %v639 = vmul.f32 %v638, %v637
  %v640 = vmul.f32 %v623, %v521
  %v641 = vadd.f32 %v639, %v640
  %643 = vst [vmem:[#allocation1] ss:$2 sm:$0xff] %v606
  %v644 = vld.sshfl [vmem:[#allocation1] sm:$0xff pattern:$0x75316420]
  %645 = vrot.lane.b32.xlu0 %v644, 96
  %v646 = vpop.permute.xlu0 %645
  %s648 = scalar_lea.vmem %s6, 16
  %649 = vst.msk [vmem:[%s648] sm:$0xf] %vm162, %v646
  %s650 = scalar_lea.vmem %s7, 12
  %651 = vst.msk [vmem:[%s650] sm:$0xf] %vm162, %v641
  %v652 = vld [vmem:[%s290] sm:$0xff]
  %v653 = vld [vmem:[%s288] sm:$0xff]
  %654 = vst [vmem:[#allocation1] ss:$2 sm:$0xff] %v606
  %v655 = vld.sshfl [vmem:[#allocation1] sm:$0xff pattern:$0x75316420]
  %656 = vrot.lane.b32.xlu0 %v655, 96
  %v657 = vpop.permute.xlu0 %656
  %v658 = vsel %vm44, %v657, 0
  %660 = vmatpush.msra.mxu0 0.0
  %661 = vmatpush.msra.mxu0 0.0
  %662 = vmatpush.msra.mxu0 0.0
  %663 = vmatpush.msra.mxu0 0.0
  %664 = vmatpush.msra.mxu0 0.0
  %665 = vmatpush.msra.mxu0 0.0
  %666 = vmatpush.msra.mxu0 0.0
  %667 = vmatpush.msra.mxu0 0.0
  %668 = vmatpush.msra.mxu0 0.0
  %669 = vmatpush.msra.mxu0 0.0
  %670 = vmatpush.msra.mxu0 0.0
  %671 = vmatpush.msra.mxu0 0.0
  %672 = vmatpush.msra.mxu0 %v28
  %673 = vmatpush.msra.mxu0 %v27
  %674 = vmatpush.msra.mxu0 %v26
  %675 = vmatpush.msra.mxu0 %v25
  %676 = vmatmul.f32.gmra.mxu0 %v658
  %v677 = vpop.f32.mrf.mxu0
  %v678 = vadd.f32 %v42, %v677
  %679 = vdwg.mxu0
  %v681 = vsel %vm44, %v641, 0
  %683 = vmatpush.msra.mxu0 0.0
  %684 = vmatpush.msra.mxu0 0.0
  %685 = vmatpush.msra.mxu0 0.0
  %686 = vmatpush.msra.mxu0 0.0
  %687 = vmatpush.msra.mxu0 0.0
  %688 = vmatpush.msra.mxu0 0.0
  %689 = vmatpush.msra.mxu0 0.0
  %690 = vmatpush.msra.mxu0 0.0
  %691 = vmatpush.msra.mxu0 0.0
  %692 = vmatpush.msra.mxu0 0.0
  %693 = vmatpush.msra.mxu0 0.0
  %694 = vmatpush.msra.mxu0 0.0
  %695 = vmatpush.msra.mxu0 %v32
  %696 = vmatpush.msra.mxu0 %v31
  %697 = vmatpush.msra.mxu0 %v30
  %698 = vmatpush.msra.mxu0 %v29
  %699 = vmatmul.f32.gmra.mxu0 %v681
  %v700 = vpop.f32.mrf.mxu0
  %v701 = vadd.f32 %v69, %v700
  %702 = vdwg.mxu0
  %v703 = vadd.f32 %v652, %v678
  %v704 = vmul.f32 %v703, 0.5
  %v705 = vtanh.pop %v704
  %v706 = vadd.f32 %v705, 1.0
  %v707 = vmul.f32 %v706, 0.5
  %709 = vrot.lane.b32.xlu0 %v678, 64
  %v710 = vpop.permute.xlu0 %709
  %v712 = vmul.f32 %v707, %v710
  %714 = vrot.lane.b32.xlu0 %v712, 64
  %v715 = vpop.permute.xlu0 %714
  %v717 = vadd.f32 %v652, %v715
  %v718 = vtanh.pop %v717
  %v719 = vsub.f32 1.0, %v707
  %721 = vrot.lane.b32.xlu0 %v718, 96
  %v722 = vpop.permute.xlu0 %721
  %v724 = vmul.f32 %v719, %v722
  %v725 = vmul.f32 %v707, %v606
  %v726 = vadd.f32 %v724, %v725
  %728 = vrot.lane.b32.xlu0 %v701, 96
  %v729 = vpop.permute.xlu0 %728
  %v731 = vadd.f32 %v653, %v729
  %v732 = vmul.f32 %v731, 0.5
  %v733 = vtanh.pop %v732
  %v734 = vadd.f32 %v733, 1.0
  %v735 = vmul.f32 %v734, 0.5
  %v737 = vrot.slane %v653, 4
  %v739 = vadd.f32 %v737, %v729
  %v740 = vmul.f32 %v739, 0.5
  %v741 = vtanh.pop %v740
  %v742 = vadd.f32 %v741, 1.0
  %v743 = vmul.f32 %v742, 0.5
  %744 = vrot.lane.b32.xlu0 %v701, 32
  %v745 = vpop.permute.xlu0 %744
  %v747 = vmul.f32 %v735, %v745
  %748 = vrot.lane.b32.xlu0 %v653, 96
  %v749 = vpop.permute.xlu0 %748
  %v750 = vrot.slane %v749, 4
  %753 = vrot.lane.b32.xlu0 %v747, 32
  %v754 = vpop.permute.xlu0 %753
  %v756 = vadd.f32 %v750, %v754
  %v757 = vtanh.pop %v756
  %v758 = vsub.f32 1.0, %v743
  %v759 = vmul.f32 %v758, %v757
  %v760 = vmul.f32 %v743, %v641
  %v761 = vadd.f32 %v759, %v760
  %763 = vst [vmem:[#allocation1] ss:$2 sm:$0xff] %v726
  %v764 = vld.sshfl [vmem:[#allocation1] sm:$0xff pattern:$0x75316420]
  %765 = vrot.lane.b32.xlu0 %v764, 96
  %v766 = vpop.permute.xlu0 %765
  %s768 = scalar_lea.vmem %s6, 20
  %769 = vst.msk [vmem:[%s768] sm:$0xf] %vm162, %v766
  %s770 = scalar_lea.vmem %s7, 8
  %771 = vst.msk [vmem:[%s770] sm:$0xf] %vm162, %v761
  %v772 = vld [vmem:[%s168] sm:$0xff]
  %v773 = vld [vmem:[%s166] sm:$0xff]
  %774 = vst [vmem:[#allocation1] ss:$2 sm:$0xff] %v726
  %v775 = vld.sshfl [vmem:[#allocation1] sm:$0xff pattern:$0x75316420]
  %776 = vrot.lane.b32.xlu0 %v775, 96
  %v777 = vpop.permute.xlu0 %776
  %v778 = vsel %vm44, %v777, 0
  %780 = vmatpush.msra.mxu0 0.0
  %781 = vmatpush.msra.mxu0 0.0
  %782 = vmatpush.msra.mxu0 0.0
  %783 = vmatpush.msra.mxu0 0.0
  %784 = vmatpush.msra.mxu0 0.0
  %785 = vmatpush.msra.mxu0 0.0
  %786 = vmatpush.msra.mxu0 0.0
  %787 = vmatpush.msra.mxu0 0.0
  %788 = vmatpush.msra.mxu0 0.0
  %789 = vmatpush.msra.mxu0 0.0
  %790 = vmatpush.msra.mxu0 0.0
  %791 = vmatpush.msra.mxu0 0.0
  %792 = vmatpush.msra.mxu0 %v28
  %793 = vmatpush.msra.mxu0 %v27
  %794 = vmatpush.msra.mxu0 %v26
  %795 = vmatpush.msra.mxu0 %v25
  %796 = vmatmul.f32.gmra.mxu0 %v778
  %v797 = vpop.f32.mrf.mxu0
  %v798 = vadd.f32 %v42, %v797
  %799 = vdwg.mxu0
  %v801 = vsel %vm44, %v761, 0
  %803 = vmatpush.msra.mxu0 0.0
  %804 = vmatpush.msra.mxu0 0.0
  %805 = vmatpush.msra.mxu0 0.0
  %806 = vmatpush.msra.mxu0 0.0
  %807 = vmatpush.msra.mxu0 0.0
  %808 = vmatpush.msra.mxu0 0.0
  %809 = vmatpush.msra.mxu0 0.0
  %810 = vmatpush.msra.mxu0 0.0
  %811 = vmatpush.msra.mxu0 0.0
  %812 = vmatpush.msra.mxu0 0.0
  %813 = vmatpush.msra.mxu0 0.0
  %814 = vmatpush.msra.mxu0 0.0
  %815 = vmatpush.msra.mxu0 %v32
  %816 = vmatpush.msra.mxu0 %v31
  %817 = vmatpush.msra.mxu0 %v30
  %818 = vmatpush.msra.mxu0 %v29
  %819 = vmatmul.f32.gmra.mxu0 %v801
  %v820 = vpop.f32.mrf.mxu0
  %v821 = vadd.f32 %v69, %v820
  %822 = vdwg.mxu0
  %v823 = vadd.f32 %v772, %v798
  %v824 = vmul.f32 %v823, 0.5
  %v825 = vtanh.pop %v824
  %v826 = vadd.f32 %v825, 1.0
  %v827 = vmul.f32 %v826, 0.5
  %829 = vrot.lane.b32.xlu0 %v798, 64
  %v830 = vpop.permute.xlu0 %829
  %v832 = vmul.f32 %v827, %v830
  %834 = vrot.lane.b32.xlu0 %v832, 64
  %v835 = vpop.permute.xlu0 %834
  %v837 = vadd.f32 %v772, %v835
  %v838 = vtanh.pop %v837
  %v839 = vsub.f32 1.0, %v827
  %841 = vrot.lane.b32.xlu0 %v838, 96
  %v842 = vpop.permute.xlu0 %841
  %v844 = vmul.f32 %v839, %v842
  %v845 = vmul.f32 %v827, %v726
  %v846 = vadd.f32 %v844, %v845
  %848 = vrot.lane.b32.xlu0 %v821, 96
  %v849 = vpop.permute.xlu0 %848
  %v851 = vadd.f32 %v773, %v849
  %v852 = vmul.f32 %v851, 0.5
  %v853 = vtanh.pop %v852
  %v854 = vadd.f32 %v853, 1.0
  %v855 = vmul.f32 %v854, 0.5
  %v857 = vrot.slane %v773, 4
  %v859 = vadd.f32 %v857, %v849
  %v860 = vmul.f32 %v859, 0.5
  %v861 = vtanh.pop %v860
  %v862 = vadd.f32 %v861, 1.0
  %v863 = vmul.f32 %v862, 0.5
  %864 = vrot.lane.b32.xlu0 %v821, 32
  %v865 = vpop.permute.xlu0 %864
  %v867 = vmul.f32 %v855, %v865
  %868 = vrot.lane.b32.xlu0 %v773, 96
  %v869 = vpop.permute.xlu0 %868
  %v870 = vrot.slane %v869, 4
  %873 = vrot.lane.b32.xlu0 %v867, 32
  %v874 = vpop.permute.xlu0 %873
  %v876 = vadd.f32 %v870, %v874
  %v877 = vtanh.pop %v876
  %v878 = vsub.f32 1.0, %v863
  %v879 = vmul.f32 %v878, %v877
  %v880 = vmul.f32 %v863, %v761
  %v881 = vadd.f32 %v879, %v880
  %883 = vst [vmem:[#allocation1] ss:$2 sm:$0xff] %v846
  %v884 = vld.sshfl [vmem:[#allocation1] sm:$0xff pattern:$0x75316420]
  %885 = vrot.lane.b32.xlu0 %v884, 96
  %v886 = vpop.permute.xlu0 %885
  %s888 = scalar_lea.vmem %s6, 24
  %889 = vst.msk [vmem:[%s888] sm:$0xf] %vm162, %v886
  %s890 = scalar_lea.vmem %s7, 4
  %891 = vst.msk [vmem:[%s890] sm:$0xf] %vm162, %v881
  %v892 = vld [vmem:[%s39] sm:$0xff]
  %v893 = vld [vmem:[%s0] sm:$0xff]
  %894 = vst [vmem:[#allocation1] ss:$2 sm:$0xff] %v846
  %v895 = vld.sshfl [vmem:[#allocation1] sm:$0xff pattern:$0x75316420]
  %896 = vrot.lane.b32.xlu0 %v895, 96
  %v897 = vpop.permute.xlu0 %896
  %v898 = vsel %vm44, %v897, 0
  %900 = vmatpush.msra.mxu0 0.0
  %901 = vmatpush.msra.mxu0 0.0
  %902 = vmatpush.msra.mxu0 0.0
  %903 = vmatpush.msra.mxu0 0.0
  %904 = vmatpush.msra.mxu0 0.0
  %905 = vmatpush.msra.mxu0 0.0
  %906 = vmatpush.msra.mxu0 0.0
  %907 = vmatpush.msra.mxu0 0.0
  %908 = vmatpush.msra.mxu0 0.0
  %909 = vmatpush.msra.mxu0 0.0
  %910 = vmatpush.msra.mxu0 0.0
  %911 = vmatpush.msra.mxu0 0.0
  %912 = vmatpush.msra.mxu0 %v28
  %913 = vmatpush.msra.mxu0 %v27
  %914 = vmatpush.msra.mxu0 %v26
  %915 = vmatpush.msra.mxu0 %v25
  %916 = vmatmul.f32.gmra.mxu0 %v898
  %v917 = vpop.f32.mrf.mxu0
  %v918 = vadd.f32 %v42, %v917
  %919 = vdwg.mxu0
  %v921 = vsel %vm44, %v881, 0
  %923 = vmatpush.msra.mxu0 0.0
  %924 = vmatpush.msra.mxu0 0.0
  %925 = vmatpush.msra.mxu0 0.0
  %926 = vmatpush.msra.mxu0 0.0
  %927 = vmatpush.msra.mxu0 0.0
  %928 = vmatpush.msra.mxu0 0.0
  %929 = vmatpush.msra.mxu0 0.0
  %930 = vmatpush.msra.mxu0 0.0
  %931 = vmatpush.msra.mxu0 0.0
  %932 = vmatpush.msra.mxu0 0.0
  %933 = vmatpush.msra.mxu0 0.0
  %934 = vmatpush.msra.mxu0 0.0
  %935 = vmatpush.msra.mxu0 %v32
  %936 = vmatpush.msra.mxu0 %v31
  %937 = vmatpush.msra.mxu0 %v30
  %938 = vmatpush.msra.mxu0 %v29
  %939 = vmatmul.f32.gmra.mxu0 %v921
  %v940 = vpop.f32.mrf.mxu0
  %v941 = vadd.f32 %v69, %v940
  %942 = vdwg.mxu0
  %v943 = vadd.f32 %v892, %v918
  %v944 = vmul.f32 %v943, 0.5
  %v945 = vtanh.pop %v944
  %v946 = vadd.f32 %v945, 1.0
  %v947 = vmul.f32 %v946, 0.5
  %949 = vrot.lane.b32.xlu0 %v918, 64
  %v950 = vpop.permute.xlu0 %949
  %v952 = vmul.f32 %v947, %v950
  %954 = vrot.lane.b32.xlu0 %v952, 64
  %v955 = vpop.permute.xlu0 %954
  %v957 = vadd.f32 %v892, %v955
  %v958 = vtanh.pop %v957
  %v959 = vsub.f32 1.0, %v947
  %961 = vrot.lane.b32.xlu0 %v958, 96
  %v962 = vpop.permute.xlu0 %961
  %v964 = vmul.f32 %v959, %v962
  %v965 = vmul.f32 %v947, %v846
  %v966 = vadd.f32 %v964, %v965
  %968 = vrot.lane.b32.xlu0 %v941, 96
  %v969 = vpop.permute.xlu0 %968
  %v971 = vadd.f32 %v893, %v969
  %v972 = vmul.f32 %v971, 0.5
  %v973 = vtanh.pop %v972
  %v974 = vadd.f32 %v973, 1.0
  %v975 = vmul.f32 %v974, 0.5
  %v977 = vrot.slane %v893, 4
  %v979 = vadd.f32 %v977, %v969
  %v980 = vmul.f32 %v979, 0.5
  %v981 = vtanh.pop %v980
  %v982 = vadd.f32 %v981, 1.0
  %v983 = vmul.f32 %v982, 0.5
  %984 = vrot.lane.b32.xlu0 %v941, 32
  %v985 = vpop.permute.xlu0 %984
  %v987 = vmul.f32 %v975, %v985
  %988 = vrot.lane.b32.xlu0 %v893, 96
  %v989 = vpop.permute.xlu0 %988
  %v990 = vrot.slane %v989, 4
  %993 = vrot.lane.b32.xlu0 %v987, 32
  %v994 = vpop.permute.xlu0 %993
  %v996 = vadd.f32 %v990, %v994
  %v997 = vtanh.pop %v996
  %v998 = vsub.f32 1.0, %v983
  %v999 = vmul.f32 %v998, %v997
  %v1000 = vmul.f32 %v983, %v881
  %v1001 = vadd.f32 %v999, %v1000
  %1003 = vst [vmem:[#allocation1] ss:$2 sm:$0xff] %v966
  %v1004 = vld.sshfl [vmem:[#allocation1] sm:$0xff pattern:$0x75316420]
  %1005 = vrot.lane.b32.xlu0 %v1004, 96
  %v1006 = vpop.permute.xlu0 %1005
  %s1008 = scalar_lea.vmem %s6, 28
  %1009 = vst.msk [vmem:[%s1008] sm:$0xf] %vm162, %v1006
  %1010 = vst.msk [vmem:[%s7] sm:$0xf] %vm162, %v1001
  // Predicated region
  $region26: #{gru_block_forward.2} parent=0 // pred_check
    _
  $region27: #{gru_block_forward.2} parent=0 // pred_check_branch
    %1012 = sbr.rel (0) target = $region29
  $region28: #{gru_block_forward.2} parent=0 // pred_region
    _
  $region29: #{gru_block_forward.2} parent=0 // pred_fallthru
    _
  // Predicated region
  $region30: #{gru_block_forward.2} parent=0 // pred_check
    _
  $region31: #{gru_block_forward.2} parent=0 // pred_check_branch
    %1014 = sbr.rel (0) target = $region33
  $region32: #{gru_block_forward.2} parent=0 // pred_region
    _
  $region33: #{gru_block_forward.2} parent=0 // pred_fallthru
    _
  // Predicated region
  $region34: #{gru_block_forward.2} parent=0 // pred_check
    _
  $region35: #{gru_block_forward.2} parent=0 // pred_check_branch
    %1016 = sbr.rel (0) target = $region37
  $region36: #{gru_block_forward.2} parent=0 // pred_region
    _
  $region37: #{gru_block_forward.2} parent=0 // pred_fallthru
    _
  // Predicated region
  $region38: #{gru_block_forward.2} parent=0 // pred_check
    _
  $region39: #{gru_block_forward.2} parent=0 // pred_check_branch
    %1018 = sbr.rel (0) target = $region41
  $region40: #{gru_block_forward.2} parent=0 // pred_region
    _
  $region41: #{gru_block_forward.2} parent=0 // pred_fallthru
    _

</llo_original>
